<compile_context>
chip_gen: v7x
topology: tpu7x:2x2x1
jax: 0.10.0
libtpu: 0.0.40
codegen_flags: <defaults>
</compile_context>

<pallas_src>
import functools

import jax
import jax.numpy as jnp
from jax.experimental import pallas as pl
from jax.experimental.pallas import tpu as pltpu


# ----------------------------------------------------------------------------
# helpers: hardware queries, tiling, padding
# ----------------------------------------------------------------------------

def _round_up(x, m):
    return (x + m - 1) // m * m


def _pad_to(x, shape):
    pads = [(0, t - s) for s, t in zip(x.shape, shape)]
    if any(p for _, p in pads):
        return jnp.pad(x, pads)
    return x


def _largest_divisor_tile(dim, target, align):
    """Largest tile <= target that divides `dim` and is a multiple of `align`.

    Returns `dim` itself when dim <= target (full-extent blocks are always
    legal) or None when no aligned divisor exists (caller pads as a fallback).
    Picking a divisor avoids materializing a padded HBM copy of the rows.
    """
    if dim <= target:
        return dim
    t = (target // align) * align
    while t >= align:
        if dim % t == 0:
            return t
        t -= align
    return None


@functools.lru_cache(maxsize=None)
def _vmem_capacity_bytes():
    # Generation-aware: ~128 MiB on v5e/v6e, 64 MiB per TensorCore on v7x.
    try:
        cap = getattr(pltpu.get_tpu_info(), "vmem_capacity_bytes", None)
        if cap:
            return int(cap)
    except Exception:
        pass
    return 64 * 1024 * 1024          # conservative fallback (v7x per-TC)


@functools.lru_cache(maxsize=None)
def _buffered_one_supported():
    """Probe once whether pipeline_mode=pl.Buffered(1) works on this JAX/TPU.

    Single-buffering grid-invariant operands stops Pallas from allocating two
    VMEM copies of resident weights; if unsupported we silently fall back.
    """
    try:
        def probe(x_ref, w_ref, o_ref):
            o_ref[...] = x_ref[...] + w_ref[...]

        with jax.ensure_compile_time_eval():
            x = jnp.arange(16 * 128, dtype=jnp.float32).reshape(16, 128)
            w = jnp.ones((8, 128), jnp.float32)
            y = pl.pallas_call(
                probe,
                grid=(2,),
                in_specs=[
                    pl.BlockSpec((8, 128), lambda i: (i, 0)),
                    pl.BlockSpec((8, 128), lambda i: (0, 0),
                                 pipeline_mode=pl.Buffered(1)),
                ],
                out_specs=pl.BlockSpec((8, 128), lambda i: (i, 0)),
                out_shape=jax.ShapeDtypeStruct((16, 128), jnp.float32),
            )(x, w)
            jax.block_until_ready(y)
            return bool(jnp.allclose(y.astype(jnp.float32),
                                     x.astype(jnp.float32) + 1.0))
    except Exception:
        return False


def _const_spec(block_shape, index_map):
    """BlockSpec for grid-invariant operands (weights / biases)."""
    if _buffered_one_supported():
        return pl.BlockSpec(block_shape, index_map, pipeline_mode=pl.Buffered(1))
    return pl.BlockSpec(block_shape, index_map)


def _mosaic_params(dimension_semantics, est_vmem_bytes=0):
    kwargs = dict(dimension_semantics=dimension_semantics)
    cap = _vmem_capacity_bytes()
    want = est_vmem_bytes + (8 << 20)            # headroom over the estimate
    if want > (32 << 20):                        # only raise above the default
        kwargs["vmem_limit_bytes"] = int(min(want, 0.9 * cap))
    return pltpu.CompilerParams(**kwargs)


# ----------------------------------------------------------------------------
# Pallas kernels
# ----------------------------------------------------------------------------

def _linear_kernel(x_ref, w_ref, b_ref, o_ref, acc_ref):
    # Tiled (M, K) @ (K, N) + (1, N); bf16 operands, f32 accumulation.
    k = pl.program_id(2)

    @pl.when(k == 0)
    def _():
        acc_ref[...] = jnp.zeros_like(acc_ref)

    acc_ref[...] += jnp.dot(x_ref[...], w_ref[...],
                            preferred_element_type=jnp.float32)

    @pl.when(k == pl.num_programs(2) - 1)
    def _():
        o_ref[...] = (acc_ref[...] + b_ref[...]).astype(o_ref.dtype)


def _segmenter_fused_kernel(xr_ref, xt_ref, crb_ref, ctb_ref, crd_ref, ctd_ref,
                            ws_ref, wm_ref, fb_ref,
                            w0_ref, b0_ref, w1_ref, b1_ref, w2_ref, b2_ref,
                            mb_ref, md_ref):
    """Fusion_Module + binary masks + Fusion_Module_all + decoder masks.

    xr/xt:        (bm, D)   patch-token tiles of the RGB / TIR encoders (bf16)
    crb/ctb:      (Kb8, D)  binary class tokens (RGB / TIR), sublane-padded
    crd/ctd:      (Kd8, D)  decoder class tokens (RGB / TIR), sublane-padded
    ws/wm, fb:    Fusion_Module weight split (acts on sum / product) + bias
    w0..b2:       Fusion_Module_all d->2d->4d->d weights / biases
    mb/md:        (Kb8, bm) / (Kd8, bm) mask tiles, lane-dense over patches
    """
    ws = ws_ref[...]
    wm = wm_ref[...]
    fb = fb_ref[...]

    def fuse(a, b):
        # Fusion_Module: cat(a+b, a*b) @ W^T + bias, W^T split row-wise.
        return (jnp.dot(a + b, ws, preferred_element_type=jnp.float32)
                + jnp.dot(a * b, wm, preferred_element_type=jnp.float32)
                + fb)

    # Patch tokens after Fusion_Module (f32), class tokens likewise (tiny,
    # recomputed per row tile - negligible vs. the patch-token matmuls).
    x = fuse(xr_ref[...], xt_ref[...])                       # (bm, D)  f32
    clsb = fuse(crb_ref[...], ctb_ref[...]).astype(jnp.bfloat16)
    clsd = fuse(crd_ref[...], ctd_ref[...]).astype(jnp.bfloat16)

    xb = x.astype(jnp.bfloat16)

    # decoder_binary stand-in on the PRE-fusion_all tokens (matches reference):
    # lane-dense (K, patches) via dot_general contracting D - no transposes.
    mb_ref[...] = jax.lax.dot_general(
        clsb, xb, dimension_numbers=(((1,), (1,)), ((), ())),
        preferred_element_type=jnp.float32).astype(mb_ref.dtype)

    # Fusion_Module_all: d -> 2d -> 4d -> d + residual (exact: no nonlinearity).
    h = jnp.dot(xb, w0_ref[...], preferred_element_type=jnp.float32) + b0_ref[...]
    h = jnp.dot(h.astype(jnp.bfloat16), w1_ref[...],
                preferred_element_type=jnp.float32) + b1_ref[...]
    h = jnp.dot(h.astype(jnp.bfloat16), w2_ref[...],
                preferred_element_type=jnp.float32) + b2_ref[...]
    y = (h + x).astype(jnp.bfloat16)

    # decoder stand-in on the post-fusion_all tokens.
    md_ref[...] = jax.lax.dot_general(
        clsd, y, dimension_numbers=(((1,), (1,)), ((), ())),
        preferred_element_type=jnp.float32).astype(md_ref.dtype)


# ----------------------------------------------------------------------------
# Pallas wrappers
# ----------------------------------------------------------------------------

def pallas_linear(x2d, w, b, *, tm=512, tn=512, tk=512, out_dtype=jnp.bfloat16):
    """Tiled (M,K)@(K,N)+b. bf16 operands, f32 accumulate, bias in f32."""
    M, K = x2d.shape
    N = w.shape[1]

    bm = _largest_divisor_tile(M, tm, 8) or tm
    bn = _largest_divisor_tile(N, tn, 128) or tn
    # Prefer the full K when the working set is comfortably inside VMEM:
    # fewer k-steps means fewer f32 accumulator read-modify-write passes.
    if 2 * (bm * K + K * bn) <= (8 << 20):
        bk = K
    else:
        bk = _largest_divisor_tile(K, tk, 128) or tk

    Mp, Np_, Kp = _round_up(M, bm), _round_up(N, bn), _round_up(K, bk)

    x_p = _pad_to(x2d.astype(jnp.bfloat16), (Mp, Kp))
    w_p = _pad_to(w.astype(jnp.bfloat16), (Kp, Np_))
    b_p = _pad_to(b.reshape(1, -1).astype(jnp.float32), (1, Np_))

    est = (2 * 2 * (bm * bk + bk * bn) + 4 * bn      # dbl-buffered x/w + bias
           + bm * bn * (4 + 2 * 2))                  # f32 acc + dbl-buffered out
    out = pl.pallas_call(
        _linear_kernel,
        grid=(Mp // bm, Np_ // bn, Kp // bk),
        in_specs=[pl.BlockSpec((bm, bk), lambda i, j, k: (i, k)),
                  pl.BlockSpec((bk, bn), lambda i, j, k: (k, j)),
                  _const_spec((1, bn), lambda i, j, k: (0, j))],
        out_specs=pl.BlockSpec((bm, bn), lambda i, j, k: (i, j)),
        out_shape=jax.ShapeDtypeStruct((Mp, Np_), out_dtype),
        scratch_shapes=[pltpu.VMEM((bm, bn), jnp.float32)],
        compiler_params=_mosaic_params(("parallel", "parallel", "arbitrary"),
                                       est),
    )(x_p, w_p, b_p)
    return out[:M, :N]


def pallas_segmenter_fused(emb_rgb, emb_tir, tail_rgb, tail_tir,
                           fus_w, fus_b, w0, b0, w1, b1, w2, b2, *, n_cls):
    """Fused Fusion_Module + both mask projections + Fusion_Module_all.

    emb_rgb/emb_tir:   (B, Np, D)        patch tokens from the two encoders
    tail_rgb/tail_tir: (B, 2+n_cls, D)   [2 binary class tokens, n_cls tokens]
    returns masks_binary (B, 2, Np) bf16, masks (B, n_cls, Np) bf16
    (lane-dense over patches).
    """
    B, Np, D = emb_rgb.shape
    D2, D4 = w0.shape[1], w1.shape[1]
    Kb, Kd = 2, n_cls
    Kb8, Kd8 = _round_up(Kb, 8), _round_up(Kd, 8)
    bf = jnp.bfloat16

    # Sublane-pad the class-token tails to 8 rows -> unmasked mask stores.
    crb = _pad_to(tail_rgb[:, :Kb].astype(bf), (B, Kb8, D))
    ctb = _pad_to(tail_tir[:, :Kb].astype(bf), (B, Kb8, D))
    crd = _pad_to(tail_rgb[:, Kb:].astype(bf), (B, Kd8, D))
    ctd = _pad_to(tail_tir[:, Kb:].astype(bf), (B, Kd8, D))

    # Fusion_Module weight split: rows [:D] act on (x_rgb+x_tir), rows [D:] on
    # (x_rgb*x_tir), matching the cat((sum, mul), dim=2) layout.
    ws = fus_w[:D].astype(bf)
    wm = fus_w[D:].astype(bf)
    fb = fus_b.reshape(1, D).astype(jnp.float32)
    w0b, w1b, w2b = w0.astype(bf), w1.astype(bf), w2.astype(bf)
    b0f = b0.reshape(1, -1).astype(jnp.float32)
    b1f = b1.reshape(1, -1).astype(jnp.float32)
    b2f = b2.reshape(1, -1).astype(jnp.float32)

    # --- VMEM estimate (resident weights + per-row working set) -------------
    wbuf = 1 if _buffered_one_supported() else 2
    weight_bytes = wbuf * (
        2 * (2 * D * D + D * D2 + D2 * D4 + D4 * D)       # bf16 ws,wm,w0,w1,w2
        + 4 * (2 * D + D2 + D4))                          # f32 biases
    tail_bytes = 2 * 2 * 2 * (Kb8 + Kd8) * D              # 4 tails, bf16, 2-buf
    per_row = (2 * 2 * 2 * D                              # xr/xt bf16, 2-buf
               + 4 * D + 4 * D4 + 2 * D4 + 2 * D          # f32 x, f32 h, casts
               + 2 * 2 * (Kb8 + Kd8))                     # bf16 outputs, 2-buf
    resident = weight_bytes + tail_bytes

    # --- generation-aware row tile (lane axis of the mask outputs => x128) --
    cap = _vmem_capacity_bytes()
    target = 512 if cap >= (100 << 20) else 256           # v5e/v6e vs v7x
    while True:
        bm = _largest_divisor_tile(Np, target, 128)
        if bm is None:
            bm = min(target, _round_up(Np, 128))
        if resident + bm * per_row <= int(0.7 * cap) or target <= 128:
            break
        target //= 2
    # Guarantee >= 2 "parallel" grid steps so both TensorCores on 2-TC chips
    # (v7x) get work; on 1-TC chips this only adds one ~0.35us grid step.
    if B * ((Np + bm - 1) // bm) < 2 and Np >= 256:
        bm = min(bm, _round_up((Np + 1) // 2, 128))

    Npp = _round_up(Np, bm)
    xr = _pad_to(emb_rgb.astype(bf), (B, Npp, D))
    xt = _pad_to(emb_tir.astype(bf), (B, Npp, D))
    est = resident + bm * per_row

    masks_binary, masks = pl.pallas_call(
        _segmenter_fused_kernel,
        grid=(B, Npp // bm),
        in_specs=[
            pl.BlockSpec((None, bm, D), lambda b, r: (b, r, 0)),    # xr patches
            pl.BlockSpec((None, bm, D), lambda b, r: (b, r, 0)),    # xt patches
            pl.BlockSpec((None, Kb8, D), lambda b, r: (b, 0, 0)),   # cls_b rgb
            pl.BlockSpec((None, Kb8, D), lambda b, r: (b, 0, 0)),   # cls_b tir
            pl.BlockSpec((None, Kd8, D), lambda b, r: (b, 0, 0)),   # cls_d rgb
            pl.BlockSpec((None, Kd8, D), lambda b, r: (b, 0, 0)),   # cls_d tir
            _const_spec((D, D), lambda b, r: (0, 0)),               # ws
            _const_spec((D, D), lambda b, r: (0, 0)),               # wm
            _const_spec((1, D), lambda b, r: (0, 0)),               # fusion bias
            _const_spec((D, D2), lambda b, r: (0, 0)),              # w0
            _const_spec((1, D2), lambda b, r: (0, 0)),              # b0
            _const_spec((D2, D4), lambda b, r: (0, 0)),             # w1
            _const_spec((1, D4), lambda b, r: (0, 0)),              # b1
            _const_spec((D4, D), lambda b, r: (0, 0)),              # w2
            _const_spec((1, D), lambda b, r: (0, 0)),               # b2
        ],
        out_specs=(
            pl.BlockSpec((None, Kb8, bm), lambda b, r: (b, 0, r)),
            pl.BlockSpec((None, Kd8, bm), lambda b, r: (b, 0, r)),
        ),
        out_shape=(
            jax.ShapeDtypeStruct((B, Kb8, Npp), jnp.bfloat16),
            jax.ShapeDtypeStruct((B, Kd8, Npp), jnp.bfloat16),
        ),
        compiler_params=_mosaic_params(("parallel", "parallel"), est),
    )(xr, xt, crb, ctb, crd, ctd, ws, wm, fb, w0b, b0f, w1b, b1f, w2b, b2f)

    return masks_binary[:, :Kb, :Np], masks[:, :Kd, :Np]


# ----------------------------------------------------------------------------
# Plain-JAX glue (padding, patchify, resize) + parameter construction
# ----------------------------------------------------------------------------

def padding(im, patch_size):
    B, C, H, W = im.shape
    pad_h = (patch_size - H % patch_size) % patch_size
    pad_w = (patch_size - W % patch_size) % patch_size
    if pad_h or pad_w:
        im = jnp.pad(im, ((0, 0), (0, 0), (0, pad_h), (0, pad_w)))
    return im


def unpadding(x, size):
    H_ori, W_ori = size
    return x[:, :, :H_ori, :W_ori]


def patchify(im, patch_size):
    # NCHW -> (B, Np, C*P*P); patch index = h_block * (W/P) + w_block
    B, C, H, W = im.shape
    P = patch_size
    x = im.reshape(B, C, H // P, P, W // P, P)
    x = jnp.transpose(x, (0, 2, 4, 1, 3, 5))          # B, H/P, W/P, C, P, P
    return x.reshape(B, (H // P) * (W // P), C * P * P)


def make_params(key, d_model, patch_size, in_ch, n_cls):
    ks = jax.random.split(key, 8)
    s = 0.02
    patch_dim = in_ch * patch_size * patch_size
    n_tok_tail = 2 + n_cls            # 2 binary class tokens + n_cls class tokens
    bf = jnp.bfloat16
    return {
        # encoder (RGB) stand-in: patch-embed linear + class tokens
        "enc_w": (s * jax.random.normal(ks[0], (patch_dim, d_model))).astype(bf),
        "enc_b": jnp.zeros((d_model,), jnp.float32),
        "enc_tok_tail": (s * jax.random.normal(ks[1], (1, n_tok_tail, d_model))).astype(bf),
        # encoder1 (TIR) stand-in
        "enc1_w": (s * jax.random.normal(ks[2], (patch_dim, d_model))).astype(bf),
        "enc1_b": jnp.zeros((d_model,), jnp.float32),
        "enc1_tok_tail": (s * jax.random.normal(ks[3], (1, n_tok_tail, d_model))).astype(bf),
        # Fusion_Module: Linear(2d -> d), stored as (2d, d) = W^T
        "fus_w": (s * jax.random.normal(ks[4], (2 * d_model, d_model))).astype(bf),
        "fus_b": jnp.zeros((d_model,), jnp.float32),
        # Fusion_Module_all: d->2d->4d->d, stored transposed (in, out)
        "fa_w0": (s * jax.random.normal(ks[5], (d_model, 2 * d_model))).astype(bf),
        "fa_b0": jnp.zeros((2 * d_model,), jnp.float32),
        "fa_w1": (s * jax.random.normal(ks[6], (2 * d_model, 4 * d_model))).astype(bf),
        "fa_b1": jnp.zeros((4 * d_model,), jnp.float32),
        "fa_w2": (s * jax.random.normal(ks[7], (4 * d_model, d_model))).astype(bf),
        "fa_b2": jnp.zeros((d_model,), jnp.float32),
    }


def encoder_forward(im, w, b, tok_tail, patch_size):
    # TODO(synk): the real ViT encoder (attention blocks) is an injected
    # dependency not defined in this module; replaced by a patch-embed linear
    # (tiled Pallas matmul) + learned class tokens.  The leading "extra" token
    # is dropped by the Segmenter (x[:, num_extra_tokens:]) before any use, so
    # it is never materialized here (semantically identical outputs, one fewer
    # concat/slice round trip through HBM).
    B = im.shape[0]
    patches = patchify(im, patch_size)                  # (B, Np, C*P*P) bf16
    Bp, Np_, Cpp = patches.shape
    emb = pallas_linear(patches.reshape(B * Np_, Cpp), w, b).reshape(B, Np_, -1)
    tail = jnp.broadcast_to(tok_tail, (B,) + tok_tail.shape[1:])
    return emb, tail                                    # (B,Np,D), (B,2+n_cls,D)


def segmenter_forward(params, im, im_tir, *, patch_size, n_cls):
    H_ori, W_ori = im.shape[2], im.shape[3]
    # Cast to bf16 BEFORE padding/patchify: halves the HBM bytes moved by the
    # padded copy and the patchify layout transpose.
    im = padding(im.astype(jnp.bfloat16), patch_size)
    im_tir = im_tir.astype(jnp.bfloat16)    # reference pads only `im`
    H, W = im.shape[2], im.shape[3]

    emb_rgb, tail_rgb = encoder_forward(im, params["enc_w"], params["enc_b"],
                                        params["enc_tok_tail"], patch_size)
    emb_tir, tail_tir = encoder_forward(im_tir, params["enc1_w"], params["enc1_b"],
                                        params["enc1_tok_tail"], patch_size)

    # TODO(synk): the real mask-transformer decoders are injected dependencies;
    # the stand-in projections (cls @ patches^T) are fused with Fusion_Module
    # and Fusion_Module_all into a single Pallas kernel below.
    masks_binary, masks = pallas_segmenter_fused(
        emb_rgb, emb_tir, tail_rgb, tail_tir,
        params["fus_w"], params["fus_b"],
        params["fa_w0"], params["fa_b0"],
        params["fa_w1"], params["fa_b1"],
        params["fa_w2"], params["fa_b2"],
        n_cls=n_cls)

    B = masks.shape[0]
    gh, gw = H // patch_size, W // patch_size

    # bilinear upsample in bf16 (largest HBM writer of the forward pass);
    # cast to f32 only at the very end.
    Kb = masks_binary.shape[1]
    masks_binary = masks_binary.reshape(B, Kb, gh, gw)
    masks_binary = jax.image.resize(masks_binary, (B, Kb, H, W), method="bilinear")
    masks_binary = unpadding(masks_binary, (H_ori, W_ori)).astype(jnp.float32)

    Km = masks.shape[1]
    masks = masks.reshape(B, Km, gh, gw)
    masks = jax.image.resize(masks, (B, Km, H, W), method="bilinear")
    masks = unpadding(masks, (H_ori, W_ori)).astype(jnp.float32)
    return masks, masks_binary


# ----------------------------------------------------------------------------
# main
# ----------------------------------------------------------------------------

if __name__ == "__main__":
    # Warm the (cached) capability probes eagerly, outside any jit trace.
    _buffered_one_supported()
    _vmem_capacity_bytes()

    key = jax.random.PRNGKey(0)
    k_im, k_tir, k_p = jax.random.split(key, 3)

    B, C, Hs, Ws = 2, 3, 16, 16
    d_model, patch_size, n_cls = 32, 4, 3

    im = jax.random.normal(k_im, (B, C, Hs, Ws), jnp.float32)
    im_tir = jax.random.normal(k_tir, (B, C, Hs, Ws), jnp.float32)

    params = make_params(k_p, d_model, patch_size, C, n_cls)

    fwd = jax.jit(lambda p, a, b: segmenter_forward(
        p, a, b, patch_size=patch_size, n_cls=n_cls))
    masks, masks_binary = fwd(params, im, im_tir)
    jax.block_until_ready((masks, masks_binary))

    assert masks.shape == (B, n_cls, Hs, Ws), masks.shape
    assert masks_binary.shape == (B, 2, Hs, Ws), masks_binary.shape
    assert bool(jnp.all(jnp.isfinite(masks))) and bool(jnp.all(jnp.isfinite(masks_binary)))
    print("KERNEL_OK")
</pallas_src>

<mosaic_0001>
module attributes {stable_mosaic.version = 11 : i64} {
  func.func @probe(%arg0: i32, %arg1: memref<8x128xf32, #tpu.memory_space<vmem>>, %arg2: memref<8x128xf32, #tpu.memory_space<vmem>>, %arg3: memref<8x128xf32, #tpu.memory_space<vmem>>) attributes {dimension_semantics = [#tpu.dimension_semantics<arbitrary>], iteration_bounds = array<i64: 2>, scalar_prefetch = 0 : i64, scratch_operands = 0 : i64, tpu.core_type = #tpu.core_type<tc>, window_params = [{transform_indices = @transform_0, window_bounds = array<i64: 8, 128>}, {pipeline_mode = #tpu.pipeline_mode<synchronous>, transform_indices = @transform_1, window_bounds = array<i64: 8, 128>}, {transform_indices = @transform_2, window_bounds = array<i64: 8, 128>}]} {
    %c0 = arith.constant 0 : index
    %c0_0 = arith.constant 0 : index
    %0 = vector.load %arg1[%c0, %c0_0] : memref<8x128xf32, #tpu.memory_space<vmem>>, vector<8x128xf32>
    %c0_1 = arith.constant 0 : index
    %c0_2 = arith.constant 0 : index
    %1 = vector.load %arg2[%c0_1, %c0_2] : memref<8x128xf32, #tpu.memory_space<vmem>>, vector<8x128xf32>
    %2 = arith.addf %0, %1 : vector<8x128xf32>
    %c0_3 = arith.constant 0 : index
    %c0_4 = arith.constant 0 : index
    %3 = vector.load %arg3[%c0_3, %c0_4] : memref<8x128xf32, #tpu.memory_space<vmem>>, vector<8x128xf32>
    tpu.vector_store %arg3[%c0_3, %c0_4], %2 {strides = array<i32>} : memref<8x128xf32, #tpu.memory_space<vmem>>, vector<8x128xf32>,
    return
  }
  func.func @transform_0(%arg0: i32) -> (i32, i32) {
    %c0_i32 = arith.constant 0 : i32
    %c0_i32_0 = arith.constant 0 : i32
    return %arg0, %c0_i32 : i32, i32
  }
  func.func @transform_1(%arg0: i32) -> (i32, i32) {
    %c0_i32 = arith.constant 0 : i32
    %c0_i32_0 = arith.constant 0 : i32
    %c0_i32_1 = arith.constant 0 : i32
    return %c0_i32, %c0_i32_0 : i32, i32
  }
  func.func @transform_2(%arg0: i32) -> (i32, i32) {
    %c0_i32 = arith.constant 0 : i32
    %c0_i32_0 = arith.constant 0 : i32
    return %arg0, %c0_i32 : i32, i32
  }
}

module attributes {stable_mosaic.version = 11 : i64} {
  func.func @_linear_kernel(%arg0: i32, %arg1: i32, %arg2: i32, %arg3: memref<32x48xbf16, #tpu.memory_space<vmem>>, %arg4: memref<48x32xbf16, #tpu.memory_space<vmem>>, %arg5: memref<1x32xf32, #tpu.memory_space<vmem>>, %arg6: memref<32x32xbf16, #tpu.memory_space<vmem>>, %arg7: memref<32x32xf32, #tpu.memory_space<vmem>>) attributes {dimension_semantics = [#tpu.dimension_semantics<parallel>, #tpu.dimension_semantics<parallel>, #tpu.dimension_semantics<arbitrary>], iteration_bounds = array<i64: 1, 1, 1>, scalar_prefetch = 0 : i64, scratch_operands = 1 : i64, tpu.core_type = #tpu.core_type<tc>, window_params = [{transform_indices = @transform_0, window_bounds = array<i64: 32, 48>}, {transform_indices = @transform_1, window_bounds = array<i64: 48, 32>}, {transform_indices = @transform_2, window_bounds = array<i64: 1, 32>}, {transform_indices = @transform_3, window_bounds = array<i64: 32, 32>}]} {
    %c0_i32 = arith.constant 0 : i32
    %0 = arith.cmpi eq, %arg2, %c0_i32 : i32
    %1 = arith.extui %0 : i1 to i32
    %c0_i32_0 = arith.constant 0 : i32
    %2 = arith.cmpi ne, %1, %c0_i32_0 : i32
    scf.if %2 {
      %cst_10 = arith.constant 0.000000e+00 : f32
      %12 = vector.broadcast %cst_10 : f32 to vector<32x32xf32>
      %c0_11 = arith.constant 0 : index
      %c0_12 = arith.constant 0 : index
      %13 = vector.load %arg7[%c0_11, %c0_12] : memref<32x32xf32, #tpu.memory_space<vmem>>, vector<32x32xf32>
      tpu.vector_store %arg7[%c0_11, %c0_12], %12 {strides = array<i32>} : memref<32x32xf32, #tpu.memory_space<vmem>>, vector<32x32xf32>,
    } else {
    }
    %c0 = arith.constant 0 : index
    %c0_1 = arith.constant 0 : index
    %3 = vector.load %arg7[%c0, %c0_1] : memref<32x32xf32, #tpu.memory_space<vmem>>, vector<32x32xf32>
    %c0_2 = arith.constant 0 : index
    %c0_3 = arith.constant 0 : index
    %4 = vector.load %arg3[%c0_2, %c0_3] : memref<32x48xbf16, #tpu.memory_space<vmem>>, vector<32x48xbf16>
    %c0_4 = arith.constant 0 : index
    %c0_5 = arith.constant 0 : index
    %5 = vector.load %arg4[%c0_4, %c0_5] : memref<48x32xbf16, #tpu.memory_space<vmem>>, vector<48x32xbf16>
    %cst = arith.constant dense<0.000000e+00> : vector<32x32xf32>
    %6 = tpu.matmul %4, %5, %cst {dimension_numbers = #tpu.dot_dimension_numbers<[1], [0], [0], [1], [0, 0, 1, 1], [], []>} : vector<32x48xbf16>, vector<48x32xbf16>, vector<32x32xf32> -> vector<32x32xf32>
    %7 = arith.addf %3, %6 : vector<32x32xf32>
    %c0_6 = arith.constant 0 : index
    %c0_7 = arith.constant 0 : index
    %8 = vector.load %arg7[%c0_6, %c0_7] : memref<32x32xf32, #tpu.memory_space<vmem>>, vector<32x32xf32>
    tpu.vector_store %arg7[%c0_6, %c0_7], %7 {strides = array<i32>} : memref<32x32xf32, #tpu.memory_space<vmem>>, vector<32x32xf32>,
    %c0_i32_8 = arith.constant 0 : i32
    %9 = arith.cmpi eq, %arg2, %c0_i32_8 : i32
    %10 = arith.extui %9 : i1 to i32
    %c0_i32_9 = arith.constant 0 : i32
    %11 = arith.cmpi ne, %10, %c0_i32_9 : i32
    scf.if %11 {
      %c0_10 = arith.constant 0 : index
      %c0_11 = arith.constant 0 : index
      %12 = vector.load %arg7[%c0_10, %c0_11] : memref<32x32xf32, #tpu.memory_space<vmem>>, vector<32x32xf32>
      %c0_12 = arith.constant 0 : index
      %c0_13 = arith.constant 0 : index
      %13 = vector.load %arg5[%c0_12, %c0_13] : memref<1x32xf32, #tpu.memory_space<vmem>>, vector<1x32xf32>
      %14 = vector.broadcast %13 : vector<1x32xf32> to vector<32x32xf32>
      %15 = arith.addf %12, %14 : vector<32x32xf32>
      %16 = arith.truncf %15 : vector<32x32xf32> to vector<32x32xbf16>
      %c0_14 = arith.constant 0 : index
      %c0_15 = arith.constant 0 : index
      %17 = vector.load %arg6[%c0_14, %c0_15] : memref<32x32xbf16, #tpu.memory_space<vmem>>, vector<32x32xbf16>
      tpu.vector_store %arg6[%c0_14, %c0_15], %16 {strides = array<i32>} : memref<32x32xbf16, #tpu.memory_space<vmem>>, vector<32x32xbf16>,
    } else {
    }
    return
  }
  func.func @transform_0(%arg0: i32, %arg1: i32, %arg2: i32) -> (i32, i32) {
    %c0_i32 = arith.constant 0 : i32
    return %arg0, %arg2 : i32, i32
  }
  func.func @transform_1(%arg0: i32, %arg1: i32, %arg2: i32) -> (i32, i32) {
    %c0_i32 = arith.constant 0 : i32
    return %arg2, %arg1 : i32, i32
  }
  func.func @transform_2(%arg0: i32, %arg1: i32, %arg2: i32) -> (i32, i32) {
    %c0_i32 = arith.constant 0 : i32
    %c0_i32_0 = arith.constant 0 : i32
    return %c0_i32, %arg1 : i32, i32
  }
  func.func @transform_3(%arg0: i32, %arg1: i32, %arg2: i32) -> (i32, i32) {
    %c0_i32 = arith.constant 0 : i32
    return %arg0, %arg1 : i32, i32
  }
}

module attributes {stable_mosaic.version = 11 : i64} {
  func.func @_segmenter_fused_kernel(%arg0: i32, %arg1: i32, %arg2: memref<1x16x32xbf16, #tpu.memory_space<vmem>>, %arg3: memref<1x16x32xbf16, #tpu.memory_space<vmem>>, %arg4: memref<1x8x32xbf16, #tpu.memory_space<vmem>>, %arg5: memref<1x8x32xbf16, #tpu.memory_space<vmem>>, %arg6: memref<1x8x32xbf16, #tpu.memory_space<vmem>>, %arg7: memref<1x8x32xbf16, #tpu.memory_space<vmem>>, %arg8: memref<32x32xbf16, #tpu.memory_space<vmem>>, %arg9: memref<32x32xbf16, #tpu.memory_space<vmem>>, %arg10: memref<1x32xf32, #tpu.memory_space<vmem>>, %arg11: memref<32x64xbf16, #tpu.memory_space<vmem>>, %arg12: memref<1x64xf32, #tpu.memory_space<vmem>>, %arg13: memref<64x128xbf16, #tpu.memory_space<vmem>>, %arg14: memref<1x128xf32, #tpu.memory_space<vmem>>, %arg15: memref<128x32xbf16, #tpu.memory_space<vmem>>, %arg16: memref<1x32xf32, #tpu.memory_space<vmem>>, %arg17: memref<1x8x16xbf16, #tpu.memory_space<vmem>>, %arg18: memref<1x8x16xbf16, #tpu.memory_space<vmem>>) attributes {dimension_semantics = [#tpu.dimension_semantics<parallel>, #tpu.dimension_semantics<parallel>], iteration_bounds = array<i64: 2, 1>, scalar_prefetch = 0 : i64, scratch_operands = 0 : i64, tpu.core_type = #tpu.core_type<tc>, window_params = [{transform_indices = @transform_0, window_bounds = array<i64: 1, 16, 32>}, {transform_indices = @transform_1, window_bounds = array<i64: 1, 16, 32>}, {transform_indices = @transform_2, window_bounds = array<i64: 1, 8, 32>}, {transform_indices = @transform_3, window_bounds = array<i64: 1, 8, 32>}, {transform_indices = @transform_4, window_bounds = array<i64: 1, 8, 32>}, {transform_indices = @transform_5, window_bounds = array<i64: 1, 8, 32>}, {pipeline_mode = #tpu.pipeline_mode<synchronous>, transform_indices = @transform_6, window_bounds = array<i64: 32, 32>}, {pipeline_mode = #tpu.pipeline_mode<synchronous>, transform_indices = @transform_7, window_bounds = array<i64: 32, 32>}, {pipeline_mode = #tpu.pipeline_mode<synchronous>, transform_indices = @transform_8, window_bounds = array<i64: 1, 32>}, {pipeline_mode = #tpu.pipeline_mode<synchronous>, transform_indices = @transform_9, window_bounds = array<i64: 32, 64>}, {pipeline_mode = #tpu.pipeline_mode<synchronous>, transform_indices = @transform_10, window_bounds = array<i64: 1, 64>}, {pipeline_mode = #tpu.pipeline_mode<synchronous>, transform_indices = @transform_11, window_bounds = array<i64: 64, 128>}, {pipeline_mode = #tpu.pipeline_mode<synchronous>, transform_indices = @transform_12, window_bounds = array<i64: 1, 128>}, {pipeline_mode = #tpu.pipeline_mode<synchronous>, transform_indices = @transform_13, window_bounds = array<i64: 128, 32>}, {pipeline_mode = #tpu.pipeline_mode<synchronous>, transform_indices = @transform_14, window_bounds = array<i64: 1, 32>}, {transform_indices = @transform_15, window_bounds = array<i64: 1, 8, 16>}, {transform_indices = @transform_16, window_bounds = array<i64: 1, 8, 16>}]} {
    %c0 = arith.constant 0 : index
    %c0_0 = arith.constant 0 : index
    %0 = vector.load %arg8[%c0, %c0_0] : memref<32x32xbf16, #tpu.memory_space<vmem>>, vector<32x32xbf16>
    %c0_1 = arith.constant 0 : index
    %c0_2 = arith.constant 0 : index
    %1 = vector.load %arg9[%c0_1, %c0_2] : memref<32x32xbf16, #tpu.memory_space<vmem>>, vector<32x32xbf16>
    %c0_3 = arith.constant 0 : index
    %c0_4 = arith.constant 0 : index
    %2 = vector.load %arg10[%c0_3, %c0_4] : memref<1x32xf32, #tpu.memory_space<vmem>>, vector<1x32xf32>
    %c0_5 = arith.constant 0 : index
    %c0_6 = arith.constant 0 : index
    %c0_7 = arith.constant 0 : index
    %3 = vector.load %arg2[%c0_5, %c0_6, %c0_7] : memref<1x16x32xbf16, #tpu.memory_space<vmem>>, vector<1x16x32xbf16>
    %4 = vector.shape_cast %3 : vector<1x16x32xbf16> to vector<16x32xbf16>
    %c0_8 = arith.constant 0 : index
    %c0_9 = arith.constant 0 : index
    %c0_10 = arith.constant 0 : index
    %5 = vector.load %arg3[%c0_8, %c0_9, %c0_10] : memref<1x16x32xbf16, #tpu.memory_space<vmem>>, vector<1x16x32xbf16>
    %6 = vector.shape_cast %5 : vector<1x16x32xbf16> to vector<16x32xbf16>
    %7 = arith.addf %4, %6 : vector<16x32xbf16>
    %cst = arith.constant dense<0.000000e+00> : vector<16x32xf32>
    %8 = tpu.matmul %7, %0, %cst {dimension_numbers = #tpu.dot_dimension_numbers<[1], [0], [0], [1], [0, 0, 1, 1], [], []>} : vector<16x32xbf16>, vector<32x32xbf16>, vector<16x32xf32> -> vector<16x32xf32>
    %9 = arith.mulf %4, %6 : vector<16x32xbf16>
    %cst_11 = arith.constant dense<0.000000e+00> : vector<16x32xf32>
    %10 = tpu.matmul %9, %1, %cst_11 {dimension_numbers = #tpu.dot_dimension_numbers<[1], [0], [0], [1], [0, 0, 1, 1], [], []>} : vector<16x32xbf16>, vector<32x32xbf16>, vector<16x32xf32> -> vector<16x32xf32>
    %11 = arith.addf %8, %10 : vector<16x32xf32>
    %12 = vector.broadcast %2 : vector<1x32xf32> to vector<16x32xf32>
    %13 = arith.addf %11, %12 : vector<16x32xf32>
    %c0_12 = arith.constant 0 : index
    %c0_13 = arith.constant 0 : index
    %c0_14 = arith.constant 0 : index
    %14 = vector.load %arg4[%c0_12, %c0_13, %c0_14] : memref<1x8x32xbf16, #tpu.memory_space<vmem>>, vector<1x8x32xbf16>
    %15 = vector.shape_cast %14 : vector<1x8x32xbf16> to vector<8x32xbf16>
    %c0_15 = arith.constant 0 : index
    %c0_16 = arith.constant 0 : index
    %c0_17 = arith.constant 0 : index
    %16 = vector.load %arg5[%c0_15, %c0_16, %c0_17] : memref<1x8x32xbf16, #tpu.memory_space<vmem>>, vector<1x8x32xbf16>
    %17 = vector.shape_cast %16 : vector<1x8x32xbf16> to vector<8x32xbf16>
    %18 = arith.addf %15, %17 : vector<8x32xbf16>
    %cst_18 = arith.constant dense<0.000000e+00> : vector<8x32xf32>
    %19 = tpu.matmul %18, %0, %cst_18 {dimension_numbers = #tpu.dot_dimension_numbers<[1], [0], [0], [1], [0, 0, 1, 1], [], []>} : vector<8x32xbf16>, vector<32x32xbf16>, vector<8x32xf32> -> vector<8x32xf32>
    %20 = arith.mulf %15, %17 : vector<8x32xbf16>
    %cst_19 = arith.constant dense<0.000000e+00> : vector<8x32xf32>
    %21 = tpu.matmul %20, %1, %cst_19 {dimension_numbers = #tpu.dot_dimension_numbers<[1], [0], [0], [1], [0, 0, 1, 1], [], []>} : vector<8x32xbf16>, vector<32x32xbf16>, vector<8x32xf32> -> vector<8x32xf32>
    %22 = arith.addf %19, %21 : vector<8x32xf32>
    %23 = vector.broadcast %2 : vector<1x32xf32> to vector<8x32xf32>
    %24 = arith.addf %22, %23 : vector<8x32xf32>
    %25 = arith.truncf %24 : vector<8x32xf32> to vector<8x32xbf16>
    %c0_20 = arith.constant 0 : index
    %c0_21 = arith.constant 0 : index
    %c0_22 = arith.constant 0 : index
    %26 = vector.load %arg6[%c0_20, %c0_21, %c0_22] : memref<1x8x32xbf16, #tpu.memory_space<vmem>>, vector<1x8x32xbf16>
    %27 = vector.shape_cast %26 : vector<1x8x32xbf16> to vector<8x32xbf16>
    %c0_23 = arith.constant 0 : index
    %c0_24 = arith.constant 0 : index
    %c0_25 = arith.constant 0 : index
    %28 = vector.load %arg7[%c0_23, %c0_24, %c0_25] : memref<1x8x32xbf16, #tpu.memory_space<vmem>>, vector<1x8x32xbf16>
    %29 = vector.shape_cast %28 : vector<1x8x32xbf16> to vector<8x32xbf16>
    %30 = arith.addf %27, %29 : vector<8x32xbf16>
    %cst_26 = arith.constant dense<0.000000e+00> : vector<8x32xf32>
    %31 = tpu.matmul %30, %0, %cst_26 {dimension_numbers = #tpu.dot_dimension_numbers<[1], [0], [0], [1], [0, 0, 1, 1], [], []>} : vector<8x32xbf16>, vector<32x32xbf16>, vector<8x32xf32> -> vector<8x32xf32>
    %32 = arith.mulf %27, %29 : vector<8x32xbf16>
    %cst_27 = arith.constant dense<0.000000e+00> : vector<8x32xf32>
    %33 = tpu.matmul %32, %1, %cst_27 {dimension_numbers = #tpu.dot_dimension_numbers<[1], [0], [0], [1], [0, 0, 1, 1], [], []>} : vector<8x32xbf16>, vector<32x32xbf16>, vector<8x32xf32> -> vector<8x32xf32>
    %34 = arith.addf %31, %33 : vector<8x32xf32>
    %35 = vector.broadcast %2 : vector<1x32xf32> to vector<8x32xf32>
    %36 = arith.addf %34, %35 : vector<8x32xf32>
    %37 = arith.truncf %36 : vector<8x32xf32> to vector<8x32xbf16>
    %38 = arith.truncf %13 : vector<16x32xf32> to vector<16x32xbf16>
    %cst_28 = arith.constant dense<0.000000e+00> : vector<8x16xf32>
    %39 = tpu.matmul %25, %38, %cst_28 {dimension_numbers = #tpu.dot_dimension_numbers<[1], [1], [0], [0], [0, 0, 1, 0], [], []>} : vector<8x32xbf16>, vector<16x32xbf16>, vector<8x16xf32> -> vector<8x16xf32>
    %40 = arith.truncf %39 : vector<8x16xf32> to vector<8x16xbf16>
    %c0_29 = arith.constant 0 : index
    %c0_30 = arith.constant 0 : index
    %c0_31 = arith.constant 0 : index
    %41 = vector.load %arg17[%c0_29, %c0_30, %c0_31] : memref<1x8x16xbf16, #tpu.memory_space<vmem>>, vector<1x8x16xbf16>
    %42 = vector.shape_cast %41 : vector<1x8x16xbf16> to vector<8x16xbf16>
    %43 = vector.shape_cast %40 : vector<8x16xbf16> to vector<1x8x16xbf16>
    tpu.vector_store %arg17[%c0_29, %c0_30, %c0_31], %43 {strides = array<i32>} : memref<1x8x16xbf16, #tpu.memory_space<vmem>>, vector<1x8x16xbf16>,
    %c0_32 = arith.constant 0 : index
    %c0_33 = arith.constant 0 : index
    %44 = vector.load %arg11[%c0_32, %c0_33] : memref<32x64xbf16, #tpu.memory_space<vmem>>, vector<32x64xbf16>
    %cst_34 = arith.constant dense<0.000000e+00> : vector<16x64xf32>
    %45 = tpu.matmul %38, %44, %cst_34 {dimension_numbers = #tpu.dot_dimension_numbers<[1], [0], [0], [1], [0, 0, 1, 1], [], []>} : vector<16x32xbf16>, vector<32x64xbf16>, vector<16x64xf32> -> vector<16x64xf32>
    %c0_35 = arith.constant 0 : index
    %c0_36 = arith.constant 0 : index
    %46 = vector.load %arg12[%c0_35, %c0_36] : memref<1x64xf32, #tpu.memory_space<vmem>>, vector<1x64xf32>
    %47 = vector.broadcast %46 : vector<1x64xf32> to vector<16x64xf32>
    %48 = arith.addf %45, %47 : vector<16x64xf32>
    %49 = arith.truncf %48 : vector<16x64xf32> to vector<16x64xbf16>
    %c0_37 = arith.constant 0 : index
    %c0_38 = arith.constant 0 : index
    %50 = vector.load %arg13[%c0_37, %c0_38] : memref<64x128xbf16, #tpu.memory_space<vmem>>, vector<64x128xbf16>
    %cst_39 = arith.constant dense<0.000000e+00> : vector<16x128xf32>
    %51 = tpu.matmul %49, %50, %cst_39 {dimension_numbers = #tpu.dot_dimension_numbers<[1], [0], [0], [1], [0, 0, 1, 1], [], []>} : vector<16x64xbf16>, vector<64x128xbf16>, vector<16x128xf32> -> vector<16x128xf32>
    %c0_40 = arith.constant 0 : index
    %c0_41 = arith.constant 0 : index
    %52 = vector.load %arg14[%c0_40, %c0_41] : memref<1x128xf32, #tpu.memory_space<vmem>>, vector<1x128xf32>
    %53 = vector.broadcast %52 : vector<1x128xf32> to vector<16x128xf32>
    %54 = arith.addf %51, %53 : vector<16x128xf32>
    %55 = arith.truncf %54 : vector<16x128xf32> to vector<16x128xbf16>
    %c0_42 = arith.constant 0 : index
    %c0_43 = arith.constant 0 : index
    %56 = vector.load %arg15[%c0_42, %c0_43] : memref<128x32xbf16, #tpu.memory_space<vmem>>, vector<128x32xbf16>
    %cst_44 = arith.constant dense<0.000000e+00> : vector<16x32xf32>
    %57 = tpu.matmul %55, %56, %cst_44 {dimension_numbers = #tpu.dot_dimension_numbers<[1], [0], [0], [1], [0, 0, 1, 1], [], []>} : vector<16x128xbf16>, vector<128x32xbf16>, vector<16x32xf32> -> vector<16x32xf32>
    %c0_45 = arith.constant 0 : index
    %c0_46 = arith.constant 0 : index
    %58 = vector.load %arg16[%c0_45, %c0_46] : memref<1x32xf32, #tpu.memory_space<vmem>>, vector<1x32xf32>
    %59 = vector.broadcast %58 : vector<1x32xf32> to vector<16x32xf32>
    %60 = arith.addf %57, %59 : vector<16x32xf32>
    %61 = arith.addf %60, %13 : vector<16x32xf32>
    %62 = arith.truncf %61 : vector<16x32xf32> to vector<16x32xbf16>
    %cst_47 = arith.constant dense<0.000000e+00> : vector<8x16xf32>
    %63 = tpu.matmul %37, %62, %cst_47 {dimension_numbers = #tpu.dot_dimension_numbers<[1], [1], [0], [0], [0, 0, 1, 0], [], []>} : vector<8x32xbf16>, vector<16x32xbf16>, vector<8x16xf32> -> vector<8x16xf32>
    %64 = arith.truncf %63 : vector<8x16xf32> to vector<8x16xbf16>
    %c0_48 = arith.constant 0 : index
    %c0_49 = arith.constant 0 : index
    %c0_50 = arith.constant 0 : index
    %65 = vector.load %arg18[%c0_48, %c0_49, %c0_50] : memref<1x8x16xbf16, #tpu.memory_space<vmem>>, vector<1x8x16xbf16>
    %66 = vector.shape_cast %65 : vector<1x8x16xbf16> to vector<8x16xbf16>
    %67 = vector.shape_cast %64 : vector<8x16xbf16> to vector<1x8x16xbf16>
    tpu.vector_store %arg18[%c0_48, %c0_49, %c0_50], %67 {strides = array<i32>} : memref<1x8x16xbf16, #tpu.memory_space<vmem>>, vector<1x8x16xbf16>,
    return
  }
  func.func @transform_0(%arg0: i32, %arg1: i32) -> (i32, i32, i32) {
    %c0_i32 = arith.constant 0 : i32
    %c0_i32_0 = arith.constant 0 : i32
    return %arg0, %arg1, %c0_i32 : i32, i32, i32
  }
  func.func @transform_1(%arg0: i32, %arg1: i32) -> (i32, i32, i32) {
    %c0_i32 = arith.constant 0 : i32
    %c0_i32_0 = arith.constant 0 : i32
    return %arg0, %arg1, %c0_i32 : i32, i32, i32
  }
  func.func @transform_2(%arg0: i32, %arg1: i32) -> (i32, i32, i32) {
    %c0_i32 = arith.constant 0 : i32
    %c0_i32_0 = arith.constant 0 : i32
    %c0_i32_1 = arith.constant 0 : i32
    return %arg0, %c0_i32, %c0_i32_0 : i32, i32, i32
  }
  func.func @transform_3(%arg0: i32, %arg1: i32) -> (i32, i32, i32) {
    %c0_i32 = arith.constant 0 : i32
    %c0_i32_0 = arith.constant 0 : i32
    %c0_i32_1 = arith.constant 0 : i32
    return %arg0, %c0_i32, %c0_i32_0 : i32, i32, i32
  }
  func.func @transform_4(%arg0: i32, %arg1: i32) -> (i32, i32, i32) {
    %c0_i32 = arith.constant 0 : i32
    %c0_i32_0 = arith.constant 0 : i32
    %c0_i32_1 = arith.constant 0 : i32
    return %arg0, %c0_i32, %c0_i32_0 : i32, i32, i32
  }
  func.func @transform_5(%arg0: i32, %arg1: i32) -> (i32, i32, i32) {
    %c0_i32 = arith.constant 0 : i32
    %c0_i32_0 = arith.constant 0 : i32
    %c0_i32_1 = arith.constant 0 : i32
    return %arg0, %c0_i32, %c0_i32_0 : i32, i32, i32
  }
  func.func @transform_6(%arg0: i32, %arg1: i32) -> (i32, i32) {
    %c0_i32 = arith.constant 0 : i32
    %c0_i32_0 = arith.constant 0 : i32
    %c0_i32_1 = arith.constant 0 : i32
    return %c0_i32, %c0_i32_0 : i32, i32
  }
  func.func @transform_7(%arg0: i32, %arg1: i32) -> (i32, i32) {
    %c0_i32 = arith.constant 0 : i32
    %c0_i32_0 = arith.constant 0 : i32
    %c0_i32_1 = arith.constant 0 : i32
    return %c0_i32, %c0_i32_0 : i32, i32
  }
  func.func @transform_8(%arg0: i32, %arg1: i32) -> (i32, i32) {
    %c0_i32 = arith.constant 0 : i32
    %c0_i32_0 = arith.constant 0 : i32
    %c0_i32_1 = arith.constant 0 : i32
    return %c0_i32, %c0_i32_0 : i32, i32
  }
  func.func @transform_9(%arg0: i32, %arg1: i32) -> (i32, i32) {
    %c0_i32 = arith.constant 0 : i32
    %c0_i32_0 = arith.constant 0 : i32
    %c0_i32_1 = arith.constant 0 : i32
    return %c0_i32, %c0_i32_0 : i32, i32
  }
  func.func @transform_10(%arg0: i32, %arg1: i32) -> (i32, i32) {
    %c0_i32 = arith.constant 0 : i32
    %c0_i32_0 = arith.constant 0 : i32
    %c0_i32_1 = arith.constant 0 : i32
    return %c0_i32, %c0_i32_0 : i32, i32
  }
  func.func @transform_11(%arg0: i32, %arg1: i32) -> (i32, i32) {
    %c0_i32 = arith.constant 0 : i32
    %c0_i32_0 = arith.constant 0 : i32
    %c0_i32_1 = arith.constant 0 : i32
    return %c0_i32, %c0_i32_0 : i32, i32
  }
  func.func @transform_12(%arg0: i32, %arg1: i32) -> (i32, i32) {
    %c0_i32 = arith.constant 0 : i32
    %c0_i32_0 = arith.constant 0 : i32
    %c0_i32_1 = arith.constant 0 : i32
    return %c0_i32, %c0_i32_0 : i32, i32
  }
  func.func @transform_13(%arg0: i32, %arg1: i32) -> (i32, i32) {
    %c0_i32 = arith.constant 0 : i32
    %c0_i32_0 = arith.constant 0 : i32
    %c0_i32_1 = arith.constant 0 : i32
    return %c0_i32, %c0_i32_0 : i32, i32
  }
  func.func @transform_14(%arg0: i32, %arg1: i32) -> (i32, i32) {
    %c0_i32 = arith.constant 0 : i32
    %c0_i32_0 = arith.constant 0 : i32
    %c0_i32_1 = arith.constant 0 : i32
    return %c0_i32, %c0_i32_0 : i32, i32
  }
  func.func @transform_15(%arg0: i32, %arg1: i32) -> (i32, i32, i32) {
    %c0_i32 = arith.constant 0 : i32
    %c0_i32_0 = arith.constant 0 : i32
    return %arg0, %c0_i32, %arg1 : i32, i32, i32
  }
  func.func @transform_16(%arg0: i32, %arg1: i32) -> (i32, i32, i32) {
    %c0_i32 = arith.constant 0 : i32
    %c0_i32_0 = arith.constant 0 : i32
    return %arg0, %c0_i32, %arg1 : i32, i32, i32
  }
}

</mosaic_0001>

<llo_original>
// kernel: tpu_custom_call.1
$region0: #{tpu_custom_call.1}
  #allocation0 [shape = 'u32[]', space=smem, size = 0x4, offset = 0x4, fixed_abs, tag = 'smem constant byte address 0x4 - core index']
  #allocation1 [shape = 'u32[144,128]{1,0:T(1,128)}', space=vmem, size = 0x12000, scoped, tag = 'internal scratch']
  %s0 = inlined_call_operand.hbm [shape: f32[16,128], index: 0, kind: input, shape index: {}]
  %s1 = inlined_call_operand.hbm [shape: f32[8,128], index: 1, kind: input, shape index: {}]
  %s2 = inlined_call_operand.hbm [shape: f32[16,128], index: 2, kind: output, shape index: {}]
  %s3 = sld [smem:[#allocation0]]
  $region49: #{tpu_custom_call.1} parent=0
    _
  %s5 = ssub.s32 1, %s3
  %s6 = scalar_select 0, %s5, %s3
  $region1: #{tpu_custom_call.1} parent=0
    #allocation2 [shape = 'u8[8192]{0}', space=vmem, size = 0x2000, scoped, tag = 'input window, operand 0']
    #allocation3 [shape = 's32[2]{0}', space=sflag, size = 0x8, scoped, tag = 'scoped memory for tpu_custom_call.1']
    #allocation4 [shape = 's32[2]{0}', space=sflag, size = 0x8, scoped, tag = 'scoped memory for tpu_custom_call.1']
    #allocation5 [shape = 'u8[4096]{0}', space=vmem, size = 0x1000, scoped, tag = 'input window, operand 1, single buffered']
    #allocation6 [shape = 's32[1]{0}', space=sflag, size = 0x4, scoped, tag = 'scoped memory for tpu_custom_call.1']
    #allocation7 [shape = 'u8[8192]{0}', space=vmem, size = 0x2000, scoped, tag = 'output window, operand 0']
    %7 = vsyncpa [#allocation3], 0
    %s8 = scalar_lea.sflag [#allocation3], 1
    %9 = vsyncpa %s8, 0
    %10 = vsyncpa [#allocation6], 0
    %11 = vsyncpa [#allocation4], 0
    %s12 = scalar_lea.sflag [#allocation4], 1
    %13 = vsyncpa %s12, 0
    loop: start=0, step=1, limit=4
    $region2: #{tpu_custom_call.1} parent=1 // loop_pre_header
      _
    $region3: #{tpu_custom_call.1} parent=1 // loop_header
      %s15 = sphi 0, %s19
      %p16 = scmp.ge.s32.totalorder %s15, 4
      %s25 = sphi 0, %s27
      %s28 = sphi 0, %s25
      %s29 = sphi 0, %s28
      %s45 = sphi 0, %s29
      %s49 = sphi 0, %s49
      %s51 = sphi 0, %s49
      %s52 = sphi 0, %s51
      %s66 = sphi 0, %s52
      %s72 = sphi 0, %s74
      %s75 = sphi 0, %s72
      %s76 = sphi 0, %s75
      %s92 = sphi 0, %s76
    $region4: #{tpu_custom_call.1} parent=1 // loop_header_branch
      %18 = sbr.rel (%p16) target = $region8
    $region5: #{tpu_custom_call.1} parent=1 // loop_body
      %s20 = ssub.s32 %s15, 1
      %s21 = ssub.s32 %s15, 2
      %s22 = sadd.s32 %s15, 1
      %s23 = ssub.s32 %s15, %s22
      %p24 = scmp.eq.s32.totalorder %s23, 0
      %s26 = sadd.s32 %s25, 1
      %s27 = scalar_select %p24, %s25, %s26
      %p30 = pneg %p24
      %p31 = scmp.eq.s32.totalorder %s15, 1
      %p32 = por %p30, %p31
      %p33 = scmp.ne.s32.totalorder %s25, %s28
      %p34 = scmp.eq.s32.totalorder %s15, 0
      %p35 = por %p33, %p34
      %p36 = scmp.ne.s32.totalorder %s25, %s28
      %p37 = scmp.eq.s32.totalorder %s20, 1
      %p38 = por %p36, %p37
      %p39 = scmp.ne.s32.totalorder %s28, %s29
      %p40 = scmp.eq.s32.totalorder %s20, 0
      %p41 = por %p39, %p40
      %p42 = scmp.ne.s32.totalorder %s28, %s29
      %p43 = scmp.eq.s32.totalorder %s21, 1
      %p44 = por %p42, %p43
      %p46 = scmp.ne.s32.totalorder %s29, %s45
      %p47 = scmp.eq.s32.totalorder %s21, 0
      %p48 = por %p46, %p47
      %s50 = sadd.s32 %s49, 1
      %p53 = scmp.eq.s32.totalorder %s15, 1
      %p54 = scmp.ne.s32.totalorder %s49, %s51
      %p55 = scmp.eq.s32.totalorder %s15, 0
      %p56 = por %p54, %p55
      %p57 = scmp.ne.s32.totalorder %s49, %s51
      %p58 = scmp.eq.s32.totalorder %s20, 1
      %p59 = por %p57, %p58
      %p60 = scmp.ne.s32.totalorder %s51, %s52
      %p61 = scmp.eq.s32.totalorder %s20, 0
      %p62 = por %p60, %p61
      %p63 = scmp.ne.s32.totalorder %s51, %s52
      %p64 = scmp.eq.s32.totalorder %s21, 1
      %p65 = por %p63, %p64
      %p67 = scmp.ne.s32.totalorder %s52, %s66
      %p68 = scmp.eq.s32.totalorder %s21, 0
      %p69 = por %p67, %p68
      %s70 = ssub.s32 %s15, %s22
      %p71 = scmp.eq.s32.totalorder %s70, 0
      %s73 = sadd.s32 %s72, 1
      %s74 = scalar_select %p71, %s72, %s73
      %p77 = pneg %p71
      %p78 = scmp.eq.s32.totalorder %s15, 1
      %p79 = por %p77, %p78
      %p80 = scmp.ne.s32.totalorder %s72, %s75
      %p81 = scmp.eq.s32.totalorder %s15, 0
      %p82 = por %p80, %p81
      %p83 = scmp.ne.s32.totalorder %s72, %s75
      %p84 = scmp.eq.s32.totalorder %s20, 1
      %p85 = por %p83, %p84
      %p86 = scmp.ne.s32.totalorder %s75, %s76
      %p87 = scmp.eq.s32.totalorder %s20, 0
      %p88 = por %p86, %p87
      %p89 = scmp.ne.s32.totalorder %s75, %s76
      %p90 = scmp.eq.s32.totalorder %s21, 1
      %p91 = por %p89, %p90
      %p93 = scmp.ne.s32.totalorder %s76, %s92
      %p94 = scmp.eq.s32.totalorder %s21, 0
      %p95 = por %p93, %p94
      %p96 = scmp.le.s32.totalorder 1, %s15
      %p97 = scmp.lt.s32.totalorder %s15, 3
      %p98 = pnand %p96, %p97
      %p99 = pneg %p98
      // Predicated region
      $region9: #{tpu_custom_call.1} parent=5 // pred_check
        _
      $region10: #{tpu_custom_call.1} parent=5 // pred_check_branch
        %101 = sbr.rel (%p98) target = $region12
      $region11: #{tpu_custom_call.1} parent=5 // pred_region
        %s102 = ssub.s32 %s15, 1
        // Predicated region
        $region13: #{tpu_custom_call.1} parent=11 // pred_check
          %p103 = pneg %p62
        $region14: #{tpu_custom_call.1} parent=11 // pred_check_branch
          %105 = sbr.rel (%p103) target = $region16
        $region15: #{tpu_custom_call.1} parent=11 // pred_region
          %s107 = ssub.s32 128, 128
          %108 = vsyncadd [#allocation6], %s107
          %s110 = sshll.u32 [#allocation5], 4
          %s111 = int_to_ptr.vmem [resolvable:$true] %s110
          %113 = dma.hbm_to_vmem [thread:$0]  %s1, 128, %s111, [#allocation6]
        $region16: #{tpu_custom_call.1} parent=11 // pred_fallthru
          _
      $region12: #{tpu_custom_call.1} parent=5 // pred_fallthru
        _
      %p114 = scmp.lt.s32.totalorder %s15, 2
      // Predicated region
      $region17: #{tpu_custom_call.1} parent=5 // pred_check
        %p115 = pneg %p114
      $region18: #{tpu_custom_call.1} parent=5 // pred_check_branch
        %117 = sbr.rel (%p115) target = $region20
      $region19: #{tpu_custom_call.1} parent=5 // pred_region
        // Predicated region
        $region21: #{tpu_custom_call.1} parent=19 // pred_check
          %p118 = pneg %p35
        $region22: #{tpu_custom_call.1} parent=19 // pred_check_branch
          %120 = sbr.rel (%p118) target = $region24
        $region23: #{tpu_custom_call.1} parent=19 // pred_region
          %s121 = sand.u32 %s25, 1
          %s122 = scalar_lea.sflag [#allocation3], %s121
          %s123 = sand.u32 %s25, 1
          %s124 = smul.addr %s123, 8
          %s125 = scalar_lea.vmem [#allocation2], %s124
          %s127 = ssub.s32 128, 128
          %128 = vsyncadd %s122, %s127
          %s129 = smul.addr %s15, 128
          %s130 = scalar_lea.hbm %s0, %s129
          %s132 = sshll.u32 %s125, 4
          %s133 = int_to_ptr.vmem [resolvable:$true] %s132
          %135 = dma.hbm_to_vmem [thread:$0]  %s130, 128, %s133, %s122
        $region24: #{tpu_custom_call.1} parent=19 // pred_fallthru
          _
      $region20: #{tpu_custom_call.1} parent=5 // pred_fallthru
        _
      %p136 = scmp.le.s32.totalorder 1, %s15
      %p137 = scmp.lt.s32.totalorder %s15, 3
      %p138 = pnand %p136, %p137
      %p139 = pneg %p138
      // Predicated region
      $region25: #{tpu_custom_call.1} parent=5 // pred_check
        _
      $region26: #{tpu_custom_call.1} parent=5 // pred_check_branch
        %141 = sbr.rel (%p138) target = $region28
      $region27: #{tpu_custom_call.1} parent=5 // pred_region
        %s142 = ssub.s32 %s15, 1
        %s143 = sand.u32 %s28, 1
        %s144 = scalar_lea.sflag [#allocation3], %s143
        %s145 = sand.u32 %s28, 1
        %s146 = smul.addr %s145, 8
        %s147 = scalar_lea.vmem [#allocation2], %s146
        // Predicated region
        $region29: #{tpu_custom_call.1} parent=27 // pred_check
          %p148 = pneg %p41
        $region30: #{tpu_custom_call.1} parent=27 // pred_check_branch
          %150 = sbr.rel (%p148) target = $region32
        $region31: #{tpu_custom_call.1} parent=27 // pred_region
          %151 = dma.done %s144, 128
        $region32: #{tpu_custom_call.1} parent=27 // pred_fallthru
          _
        // Predicated region
        $region33: #{tpu_custom_call.1} parent=27 // pred_check
          %p152 = pneg %p62
        $region34: #{tpu_custom_call.1} parent=27 // pred_check_branch
          %154 = sbr.rel (%p152) target = $region36
        $region35: #{tpu_custom_call.1} parent=27 // pred_region
          %155 = dma.done [#allocation6], 128
        $region36: #{tpu_custom_call.1} parent=27 // pred_fallthru
          _
        %s156 = sand.u32 %s28, 1
        %s157 = scalar_lea.sflag [#allocation3], %s156
        %s158 = sand.u32 %s28, 1
        %s159 = smul.addr %s158, 8
        %s160 = scalar_lea.vmem [#allocation2], %s159
        %p161 = pneg %p41
        %p162 = pneg %p38
        %p163 = pneg %p62
        %p164 = pneg %p59
        %p165 = pneg %p88
        %p166 = pneg %p85
        %s167 = sand.u32 %s75, 1
        %s168 = scalar_lea.sflag [#allocation4], %s167
        %s169 = sand.u32 %s75, 1
        %s170 = smul.addr %s169, 8
        %s171 = scalar_lea.vmem [#allocation7], %s170
        %v172 = vld [vmem:[%s147] sm:$0xff]
        %v173 = vld [vmem:[#allocation5] sm:$0xff]
        %v174 = vadd.f32 %v172, %v173
        %175 = vst [vmem:[%s171] sm:$0xff] %v174
        %s176 = sand.u32 %s75, 1
        %s177 = scalar_lea.sflag [#allocation4], %s176
        %s178 = sand.u32 %s75, 1
        %s179 = smul.addr %s178, 8
        %s180 = scalar_lea.vmem [#allocation7], %s179
        // Predicated region
        $region37: #{tpu_custom_call.1} parent=27 // pred_check
          %p181 = pneg %p85
        $region38: #{tpu_custom_call.1} parent=27 // pred_check_branch
          %183 = sbr.rel (%p181) target = $region40
        $region39: #{tpu_custom_call.1} parent=27 // pred_region
          %s185 = ssub.s32 128, 128
          %186 = vsyncadd %s177, %s185
          %s187 = smul.addr %s20, 128
          %s188 = scalar_lea.hbm %s2, %s187
          %s190 = sshll.u32 %s180, 4
          %s191 = int_to_ptr.vmem [resolvable:$true] %s190
          %193 = dma.vmem_to_hbm [thread:$0]  %s191, 128, %s188, %s177
        $region40: #{tpu_custom_call.1} parent=27 // pred_fallthru
          _
      $region28: #{tpu_custom_call.1} parent=5 // pred_fallthru
        _
      %p194 = scmp.le.s32.totalorder 2, %s15
      // Predicated region
      $region41: #{tpu_custom_call.1} parent=5 // pred_check
        %p195 = pneg %p194
      $region42: #{tpu_custom_call.1} parent=5 // pred_check_branch
        %197 = sbr.rel (%p195) target = $region44
      $region43: #{tpu_custom_call.1} parent=5 // pred_region
        %s198 = ssub.s32 %s15, 2
        // Predicated region
        $region45: #{tpu_custom_call.1} parent=43 // pred_check
          %p199 = pneg %p91
        $region46: #{tpu_custom_call.1} parent=43 // pred_check_branch
          %201 = sbr.rel (%p199) target = $region48
        $region47: #{tpu_custom_call.1} parent=43 // pred_region
          %s202 = sand.u32 %s76, 1
          %s203 = scalar_lea.sflag [#allocation4], %s202
          %s204 = sand.u32 %s76, 1
          %s205 = smul.addr %s204, 8
          %s206 = scalar_lea.vmem [#allocation7], %s205
          %207 = dma.done %s203, 128
        $region48: #{tpu_custom_call.1} parent=43 // pred_fallthru
          _
      $region44: #{tpu_custom_call.1} parent=5 // pred_fallthru
        _
    $region6: #{tpu_custom_call.1} parent=1 // loop_footer
      %s19 = sadd.s32 1, %s15
    $region7: #{tpu_custom_call.1} parent=1 // loop_footer_branch
      %14 = sbr.rel target = $region3
    $region8: #{tpu_custom_call.1} parent=1 // loop_exit
      _
    %208 = vsyncpa [#allocation3], 1
    %s209 = scalar_lea.sflag [#allocation3], 1
    %210 = vsyncpa %s209, 1
    %211 = vsyncpa [#allocation6], 1
    %212 = vsyncpa [#allocation4], 1
    %s213 = scalar_lea.sflag [#allocation4], 1
    %214 = vsyncpa %s213, 1

// kernel: _lambda_.3
$region0: #{_lambda_.3}
  #allocation0 [shape = 'u32[]', space=smem, size = 0x4, offset = 0x4, fixed_abs, tag = 'smem constant byte address 0x4 - core index']
  #allocation1 [shape = 'u32[144,128]{1,0:T(1,128)}', space=vmem, size = 0x12000, scoped, tag = 'internal scratch']
  #allocation2 [shape = 'f32[32,32]{1,0:T(8,128)}', space=vmem, size = 0x4000, scoped, tag = 'scratch operand']
  %s0 = inlined_call_operand.vmem [shape: bf16[32,48], index: 0, kind: input, shape index: {}]
  %s1 = inlined_call_operand.vmem [shape: bf16[48,32], index: 1, kind: input, shape index: {}]
  %s2 = inlined_call_operand.vmem [shape: f32[1,32], index: 2, kind: input, shape index: {}]
  %s3 = inlined_call_operand.vmem [shape: bf16[32,32], index: 3, kind: output, shape index: {}]
  %s4 = sld [smem:[#allocation0]]
  $region30: #{_lambda_.3} parent=0
    _
  %s6 = ssub.s32 1, %s4
  %s7 = scalar_select 0, %s6, %s4
  // Predicated region
  $region2: #{_lambda_.3} parent=0 // pred_check
    _
  $region3: #{_lambda_.3} parent=0 // pred_check_branch
    %9 = sbr.rel (0) target = $region5
  $region4: #{_lambda_.3} parent=0 // pred_region
    _
  $region5: #{_lambda_.3} parent=0 // pred_fallthru
    _
  // Predicated region
  $region6: #{_lambda_.3} parent=0 // pred_check
    _
  $region7: #{_lambda_.3} parent=0 // pred_check_branch
    %11 = sbr.rel (0) target = $region9
  $region8: #{_lambda_.3} parent=0 // pred_region
    _
  $region9: #{_lambda_.3} parent=0 // pred_fallthru
    _
  // Predicated region
  $region10: #{_lambda_.3} parent=0 // pred_check
    _
  $region11: #{_lambda_.3} parent=0 // pred_check_branch
    %13 = sbr.rel (0) target = $region13
  $region12: #{_lambda_.3} parent=0 // pred_region
    _
  $region13: #{_lambda_.3} parent=0 // pred_fallthru
    _
  %p15 = scmp.eq.s32.totalorder 0, 0
  // Predicated region
  $region14: #{_lambda_.3} parent=0 // pred_check
    %p16 = pneg %p15
  $region15: #{_lambda_.3} parent=0 // pred_check_branch
    %18 = sbr.rel (%p16) target = $region17
  $region16: #{_lambda_.3} parent=0 // pred_region
    %vm19 = vcmask 261120
    %20 = vst.msk [vmem:[#allocation2] sm:$0xff] %vm19, 0.0
    %21 = vst.msk [vmem:[#allocation2 + $0x8] sm:$0xff] %vm19, 0.0
    %22 = vst.msk [vmem:[#allocation2 + $0x10] sm:$0xff] %vm19, 0.0
    %23 = vst.msk [vmem:[#allocation2 + $0x18] sm:$0xff] %vm19, 0.0
  $region17: #{_lambda_.3} parent=0 // pred_fallthru
    _
  %v24 = vld [vmem:[#allocation2] sm:$0xff]
  %v25 = vld [vmem:[#allocation2 + $0x8] sm:$0xff]
  %v26 = vld [vmem:[#allocation2 + $0x10] sm:$0xff]
  %v27 = vld [vmem:[#allocation2 + $0x18] sm:$0xff]
  %v28 = vld [vmem:[%s0] sm:$0xf]
  %v29 = vld [vmem:[%s0 + $0x4] sm:$0xf]
  %v30 = vld [vmem:[%s0 + $0x8] sm:$0xf]
  %v31 = vld [vmem:[%s0 + $0xc] sm:$0xf]
  %v32 = vld [vmem:[%s1] sm:$0xf]
  %v33 = vld [vmem:[%s1 + $0x4] sm:$0xf]
  %v34 = vld [vmem:[%s1 + $0x8] sm:$0xf]
  %v35 = vld [vmem:[%s1 + $0xc] sm:$0xf]
  %v36 = vld [vmem:[%s1 + $0x10] sm:$0xf]
  %v37 = vld [vmem:[%s1 + $0x14] sm:$0xf]
  %v42 = vunpack.c.l.b16 %v28
  %v43 = vunpack.c.l.b16 %v29
  %v44 = vunpack.c.l.b16 %v30
  %v45 = vunpack.c.l.b16 %v31
  %v46 = vpack.c.b16 %v43, %v42
  %v47 = vpack.c.b16 %v45, %v44
  %v54 = vunpack.c.l.b16 %v32
  %v55 = vunpack.c.l.b16 %v33
  %v56 = vunpack.c.l.b16 %v34
  %v57 = vunpack.c.l.b16 %v35
  %v58 = vunpack.c.l.b16 %v36
  %v59 = vunpack.c.l.b16 %v37
  %v60 = vpack.c.b16 %v55, %v54
  %v61 = vpack.c.b16 %v57, %v56
  %v62 = vpack.c.b16 %v59, %v58
  %vm66 = vcmask 392192
  %v68 = vsel %vm66, %v46, 0
  %v71 = vsel %vm66, %v47, 0
  %73 = vmatprep.subr.bf16.mxu0 0
  %74 = vmatpush1.bf16.msra.mxu0 %v60
  %75 = vmatprep.subr.bf16.mxu0 0
  %76 = vmatpush1.bf16.msra.mxu0 %v61
  %77 = vmatprep.subr.bf16.mxu0 0
  %78 = vmatpush1.bf16.msra.mxu0 %v62
  %79 = vmatprep.subr.bf16.mxu0 0
  %80 = vmatpush1.bf16.msra.mxu0 0
  %81 = vmatprep.subr.bf16.mxu0 0
  %82 = vmatpush1.bf16.msra.mxu0 0
  %83 = vmatprep.subr.bf16.mxu0 0
  %84 = vmatpush1.bf16.msra.mxu0 0
  %85 = vmatprep.subr.bf16.mxu0 0
  %86 = vmatpush1.bf16.msra.mxu0 0
  %87 = vmatprep.subr.bf16.mxu0 0
  %88 = vmatpush1.bf16.msra.mxu0 0
  %89 = vmatprep.subr.bf16.mxu0 0
  %90 = vmatpush1.bf16.msra.mxu0 0
  %91 = vmatprep.subr.bf16.mxu0 0
  %92 = vmatpush1.bf16.msra.mxu0 0
  %93 = vmatprep.subr.bf16.mxu0 0
  %94 = vmatpush1.bf16.msra.mxu0 0
  %95 = vmatprep.subr.bf16.mxu0 0
  %96 = vmatpush1.bf16.msra.mxu0 0
  %97 = vmatprep.subr.bf16.mxu0 0
  %98 = vmatpush1.bf16.msra.mxu0 0
  %99 = vmatprep.subr.bf16.mxu0 0
  %100 = vmatpush1.bf16.msra.mxu0 0
  %101 = vmatprep.subr.bf16.mxu0 0
  %102 = vmatpush1.bf16.msra.mxu0 0
  %103 = vmatprep.subr.bf16.mxu0 0
  %104 = vmatpush1.bf16.msra.mxu0 0
  %105 = vmatprep.mubr.bf16.mxu0 0
  %106 = vmatmul.mubr.bf16.gmra.mrb[0].mxu0 %v68
  %v107 = vpop.f32.mrb[0].mxu0
  %v108 = vadd.f32 0.0, %v107
  %v109 = vpop.f32.mrb[0].mxu0
  %v110 = vpop.f32.mrb[0].mxu0
  %v111 = vadd.f32 0.0, %v110
  %v112 = vpop.f32.mrb[0].mxu0
  %113 = vmatprep.mubr.bf16.mxu0 0
  %114 = vmatmul.mubr.bf16.gmra.mrb[0].mxu0 %v71
  %v115 = vpop.f32.mrb[0].mxu0
  %v116 = vadd.f32 0.0, %v115
  %v117 = vpop.f32.mrb[0].mxu0
  %v118 = vpop.f32.mrb[0].mxu0
  %v119 = vadd.f32 0.0, %v118
  %v120 = vpop.f32.mrb[0].mxu0
  %121 = vdwg.mxu0
  %v122 = vadd.f32 %v24, %v108
  %v123 = vadd.f32 %v25, %v111
  %v124 = vadd.f32 %v26, %v116
  %v125 = vadd.f32 %v27, %v119
  %vm126 = vcmask 261120
  %127 = vst.msk [vmem:[#allocation2] sm:$0xff] %vm126, %v122
  %128 = vst.msk [vmem:[#allocation2 + $0x8] sm:$0xff] %vm126, %v123
  %129 = vst.msk [vmem:[#allocation2 + $0x10] sm:$0xff] %vm126, %v124
  %130 = vst.msk [vmem:[#allocation2 + $0x18] sm:$0xff] %vm126, %v125
  // Predicated region
  $region18: #{_lambda_.3} parent=0 // pred_check
    %p131 = pneg %p15
  $region19: #{_lambda_.3} parent=0 // pred_check_branch
    %133 = sbr.rel (%p131) target = $region21
  $region20: #{_lambda_.3} parent=0 // pred_region
    %v134 = vld [vmem:[#allocation2] sm:$0xff]
    %v135 = vld [vmem:[#allocation2 + $0x8] sm:$0xff]
    %v136 = vld [vmem:[#allocation2 + $0x10] sm:$0xff]
    %v137 = vld [vmem:[#allocation2 + $0x18] sm:$0xff]
    %v138 = vld [vmem:[%s2] sm:$0x1]
    %v140 = vlaneseq
    %v141 = vshrl.u32 %v140, 7
    %v142 = vsub.s32 0, %v141
    %v143 = vrot.slane %v138, %v142
    %v145 = vadd.f32 %v134, %v143
    %v146 = vadd.f32 %v135, %v143
    %v147 = vadd.f32 %v136, %v143
    %v148 = vadd.f32 %v137, %v143
    %v149 = vpack.c.bf16 %v146, %v145
    %v150 = vpack.c.bf16 %v148, %v147
    %v153 = vunpack.c.l.b16 %v149
    %v154 = vunpack.c.h.b16 %v149
    %v155 = vunpack.c.l.b16 %v150
    %v156 = vunpack.c.h.b16 %v150
    %v157 = vpack.c.b16 %v153, %v153
    %v158 = vpack.c.b16 %v154, %v154
    %v159 = vpack.c.b16 %v155, %v155
    %v160 = vpack.c.b16 %v156, %v156
    %vm165 = vcmask 257024
    %166 = vst.msk [vmem:[%s3] sm:$0xf] %vm165, %v157
    %167 = vst.msk [vmem:[%s3 + $0x4] sm:$0xf] %vm165, %v158
    %168 = vst.msk [vmem:[%s3 + $0x8] sm:$0xf] %vm165, %v159
    %169 = vst.msk [vmem:[%s3 + $0xc] sm:$0xf] %vm165, %v160
  $region21: #{_lambda_.3} parent=0 // pred_fallthru
    _
  // Predicated region
  $region22: #{_lambda_.3} parent=0 // pred_check
    _
  $region23: #{_lambda_.3} parent=0 // pred_check_branch
    %171 = sbr.rel (0) target = $region25
  $region24: #{_lambda_.3} parent=0 // pred_region
    _
  $region25: #{_lambda_.3} parent=0 // pred_fallthru
    _
  // Predicated region
  $region26: #{_lambda_.3} parent=0 // pred_check
    _
  $region27: #{_lambda_.3} parent=0 // pred_check_branch
    %173 = sbr.rel (0) target = $region29
  $region28: #{_lambda_.3} parent=0 // pred_region
    _
  $region29: #{_lambda_.3} parent=0 // pred_fallthru
    _

// kernel: _lambda_.5
$region0: #{_lambda_.5}
  #allocation0 [shape = 'u32[]', space=smem, size = 0x4, offset = 0x4, fixed_abs, tag = 'smem constant byte address 0x4 - core index']
  #allocation1 [shape = 'u32[144,128]{1,0:T(1,128)}', space=vmem, size = 0x12000, scoped, tag = 'internal scratch']
  %s0 = inlined_call_operand.vmem [shape: bf16[2,16,32], index: 0, kind: input, shape index: {}]
  %s1 = inlined_call_operand.vmem [shape: bf16[2,16,32], index: 1, kind: input, shape index: {}]
  %s2 = inlined_call_operand.vmem [shape: bf16[2,8,32], index: 2, kind: input, shape index: {}]
  %s3 = inlined_call_operand.vmem [shape: bf16[2,8,32], index: 3, kind: input, shape index: {}]
  %s4 = inlined_call_operand.vmem [shape: bf16[2,8,32], index: 4, kind: input, shape index: {}]
  %s5 = inlined_call_operand.vmem [shape: bf16[2,8,32], index: 5, kind: input, shape index: {}]
  %s6 = inlined_call_operand.vmem [shape: bf16[32,32], index: 6, kind: input, shape index: {}]
  %s7 = inlined_call_operand.vmem [shape: bf16[32,32], index: 7, kind: input, shape index: {}]
  %s8 = inlined_call_operand.vmem [shape: f32[1,32], index: 8, kind: input, shape index: {}]
  %s9 = inlined_call_operand.vmem [shape: bf16[32,64], index: 9, kind: input, shape index: {}]
  %s10 = inlined_call_operand.vmem [shape: f32[1,64], index: 10, kind: input, shape index: {}]
  %s11 = inlined_call_operand.vmem [shape: bf16[64,128], index: 11, kind: input, shape index: {}]
  %s12 = inlined_call_operand.vmem [shape: f32[1,128], index: 12, kind: input, shape index: {}]
  %s13 = inlined_call_operand.vmem [shape: bf16[128,32], index: 13, kind: input, shape index: {}]
  %s14 = inlined_call_operand.vmem [shape: f32[1,32], index: 14, kind: input, shape index: {}]
  %s15 = inlined_call_operand.vmem [shape: bf16[2,8,16], index: 15, kind: output, shape index: {0}]
  %s16 = inlined_call_operand.vmem [shape: bf16[2,8,16], index: 16, kind: output, shape index: {1}]
  %17 = xla_tuple %s15, %s16
  %s18 = sld [smem:[#allocation0]]
  $region101: #{_lambda_.5} parent=0
    _
  %s20 = ssub.s32 1, %s18
  %s21 = scalar_select 0, %s20, %s18
  loop: start=0, step=1, limit=4
  $region2: #{_lambda_.5} parent=0 // loop_pre_header
    _
  $region3: #{_lambda_.5} parent=0 // loop_header
    %s23 = sphi 0, %s27
    %p24 = scmp.ge.s32.totalorder %s23, 4
    %s30 = sphi 0, %s42
    %s31 = sphi 0, %s38
    %s32 = sphi 0, %s30
    %s33 = sphi 0, %s31
    %s34 = sphi 0, %s32
    %s35 = sphi 0, %s33
    %s47 = sphi 0, %s49
    %s50 = sphi 0, %s47
    %s51 = sphi 0, %s50
    %s67 = sphi 0, %s51
    %s75 = sphi 0, %s77
    %s78 = sphi 0, %s75
    %s79 = sphi 0, %s78
    %s95 = sphi 0, %s79
    %s101 = sphi 0, %s103
    %s104 = sphi 0, %s101
    %s105 = sphi 0, %s104
    %s121 = sphi 0, %s105
    %s127 = sphi 0, %s129
    %s130 = sphi 0, %s127
    %s131 = sphi 0, %s130
    %s147 = sphi 0, %s131
    %s153 = sphi 0, %s155
    %s156 = sphi 0, %s153
    %s157 = sphi 0, %s156
    %s173 = sphi 0, %s157
    %s179 = sphi 0, %s181
    %s182 = sphi 0, %s179
    %s183 = sphi 0, %s182
    %s199 = sphi 0, %s183
    %s203 = sphi 0, %s203
    %s205 = sphi 0, %s203
    %s206 = sphi 0, %s205
    %s220 = sphi 0, %s206
    %s224 = sphi 0, %s224
    %s226 = sphi 0, %s224
    %s227 = sphi 0, %s226
    %s241 = sphi 0, %s227
    %s245 = sphi 0, %s245
    %s247 = sphi 0, %s245
    %s248 = sphi 0, %s247
    %s262 = sphi 0, %s248
    %s266 = sphi 0, %s266
    %s268 = sphi 0, %s266
    %s269 = sphi 0, %s268
    %s283 = sphi 0, %s269
    %s287 = sphi 0, %s287
    %s289 = sphi 0, %s287
    %s290 = sphi 0, %s289
    %s304 = sphi 0, %s290
    %s308 = sphi 0, %s308
    %s310 = sphi 0, %s308
    %s311 = sphi 0, %s310
    %s325 = sphi 0, %s311
    %s329 = sphi 0, %s329
    %s331 = sphi 0, %s329
    %s332 = sphi 0, %s331
    %s346 = sphi 0, %s332
    %s350 = sphi 0, %s350
    %s352 = sphi 0, %s350
    %s353 = sphi 0, %s352
    %s367 = sphi 0, %s353
    %s371 = sphi 0, %s371
    %s373 = sphi 0, %s371
    %s374 = sphi 0, %s373
    %s388 = sphi 0, %s374
    %s396 = sphi 0, %s398
    %s399 = sphi 0, %s396
    %s400 = sphi 0, %s399
    %s416 = sphi 0, %s400
    %s424 = sphi 0, %s426
    %s427 = sphi 0, %s424
    %s428 = sphi 0, %s427
    %s444 = sphi 0, %s428
  $region4: #{_lambda_.5} parent=0 // loop_header_branch
    %26 = sbr.rel (%p24) target = $region8
  $region5: #{_lambda_.5} parent=0 // loop_body
    %s28 = ssub.s32 %s23, 1
    %s29 = ssub.s32 %s23, 2
    %s36 = sadd.s32 1, %s31
    %p37 = scmp.ge.s32.totalorder %s36, 1
    %s38 = scalar_select %p37, 0, %s36
    %s39 = sadd.s32 1, %s30
    %s40 = scalar_select %p37, %s39, %s30
    %p41 = scmp.ge.s32.totalorder %s40, 2
    %s42 = scalar_select %p41, 0, %s40
    %s43 = ssub.s32 %s30, %s42
    %s44 = ssub.s32 %s31, %s38
    %s45 = sor.u32 %s43, %s44
    %p46 = scmp.eq.s32.totalorder %s45, 0
    %s48 = sadd.s32 %s47, 1
    %s49 = scalar_select %p46, %s47, %s48
    %p52 = pneg %p46
    %p53 = scmp.eq.s32.totalorder %s23, 1
    %p54 = por %p52, %p53
    %p55 = scmp.ne.s32.totalorder %s47, %s50
    %p56 = scmp.eq.s32.totalorder %s23, 0
    %p57 = por %p55, %p56
    %p58 = scmp.ne.s32.totalorder %s47, %s50
    %p59 = scmp.eq.s32.totalorder %s28, 1
    %p60 = por %p58, %p59
    %p61 = scmp.ne.s32.totalorder %s50, %s51
    %p62 = scmp.eq.s32.totalorder %s28, 0
    %p63 = por %p61, %p62
    %p64 = scmp.ne.s32.totalorder %s50, %s51
    %p65 = scmp.eq.s32.totalorder %s29, 1
    %p66 = por %p64, %p65
    %p68 = scmp.ne.s32.totalorder %s51, %s67
    %p69 = scmp.eq.s32.totalorder %s29, 0
    %p70 = por %p68, %p69
    %s71 = ssub.s32 %s30, %s42
    %s72 = ssub.s32 %s31, %s38
    %s73 = sor.u32 %s71, %s72
    %p74 = scmp.eq.s32.totalorder %s73, 0
    %s76 = sadd.s32 %s75, 1
    %s77 = scalar_select %p74, %s75, %s76
    %p80 = pneg %p74
    %p81 = scmp.eq.s32.totalorder %s23, 1
    %p82 = por %p80, %p81
    %p83 = scmp.ne.s32.totalorder %s75, %s78
    %p84 = scmp.eq.s32.totalorder %s23, 0
    %p85 = por %p83, %p84
    %p86 = scmp.ne.s32.totalorder %s75, %s78
    %p87 = scmp.eq.s32.totalorder %s28, 1
    %p88 = por %p86, %p87
    %p89 = scmp.ne.s32.totalorder %s78, %s79
    %p90 = scmp.eq.s32.totalorder %s28, 0
    %p91 = por %p89, %p90
    %p92 = scmp.ne.s32.totalorder %s78, %s79
    %p93 = scmp.eq.s32.totalorder %s29, 1
    %p94 = por %p92, %p93
    %p96 = scmp.ne.s32.totalorder %s79, %s95
    %p97 = scmp.eq.s32.totalorder %s29, 0
    %p98 = por %p96, %p97
    %s99 = ssub.s32 %s30, %s42
    %p100 = scmp.eq.s32.totalorder %s99, 0
    %s102 = sadd.s32 %s101, 1
    %s103 = scalar_select %p100, %s101, %s102
    %p106 = pneg %p100
    %p107 = scmp.eq.s32.totalorder %s23, 1
    %p108 = por %p106, %p107
    %p109 = scmp.ne.s32.totalorder %s101, %s104
    %p110 = scmp.eq.s32.totalorder %s23, 0
    %p111 = por %p109, %p110
    %p112 = scmp.ne.s32.totalorder %s101, %s104
    %p113 = scmp.eq.s32.totalorder %s28, 1
    %p114 = por %p112, %p113
    %p115 = scmp.ne.s32.totalorder %s104, %s105
    %p116 = scmp.eq.s32.totalorder %s28, 0
    %p117 = por %p115, %p116
    %p118 = scmp.ne.s32.totalorder %s104, %s105
    %p119 = scmp.eq.s32.totalorder %s29, 1
    %p120 = por %p118, %p119
    %p122 = scmp.ne.s32.totalorder %s105, %s121
    %p123 = scmp.eq.s32.totalorder %s29, 0
    %p124 = por %p122, %p123
    %s125 = ssub.s32 %s30, %s42
    %p126 = scmp.eq.s32.totalorder %s125, 0
    %s128 = sadd.s32 %s127, 1
    %s129 = scalar_select %p126, %s127, %s128
    %p132 = pneg %p126
    %p133 = scmp.eq.s32.totalorder %s23, 1
    %p134 = por %p132, %p133
    %p135 = scmp.ne.s32.totalorder %s127, %s130
    %p136 = scmp.eq.s32.totalorder %s23, 0
    %p137 = por %p135, %p136
    %p138 = scmp.ne.s32.totalorder %s127, %s130
    %p139 = scmp.eq.s32.totalorder %s28, 1
    %p140 = por %p138, %p139
    %p141 = scmp.ne.s32.totalorder %s130, %s131
    %p142 = scmp.eq.s32.totalorder %s28, 0
    %p143 = por %p141, %p142
    %p144 = scmp.ne.s32.totalorder %s130, %s131
    %p145 = scmp.eq.s32.totalorder %s29, 1
    %p146 = por %p144, %p145
    %p148 = scmp.ne.s32.totalorder %s131, %s147
    %p149 = scmp.eq.s32.totalorder %s29, 0
    %p150 = por %p148, %p149
    %s151 = ssub.s32 %s30, %s42
    %p152 = scmp.eq.s32.totalorder %s151, 0
    %s154 = sadd.s32 %s153, 1
    %s155 = scalar_select %p152, %s153, %s154
    %p158 = pneg %p152
    %p159 = scmp.eq.s32.totalorder %s23, 1
    %p160 = por %p158, %p159
    %p161 = scmp.ne.s32.totalorder %s153, %s156
    %p162 = scmp.eq.s32.totalorder %s23, 0
    %p163 = por %p161, %p162
    %p164 = scmp.ne.s32.totalorder %s153, %s156
    %p165 = scmp.eq.s32.totalorder %s28, 1
    %p166 = por %p164, %p165
    %p167 = scmp.ne.s32.totalorder %s156, %s157
    %p168 = scmp.eq.s32.totalorder %s28, 0
    %p169 = por %p167, %p168
    %p170 = scmp.ne.s32.totalorder %s156, %s157
    %p171 = scmp.eq.s32.totalorder %s29, 1
    %p172 = por %p170, %p171
    %p174 = scmp.ne.s32.totalorder %s157, %s173
    %p175 = scmp.eq.s32.totalorder %s29, 0
    %p176 = por %p174, %p175
    %s177 = ssub.s32 %s30, %s42
    %p178 = scmp.eq.s32.totalorder %s177, 0
    %s180 = sadd.s32 %s179, 1
    %s181 = scalar_select %p178, %s179, %s180
    %p184 = pneg %p178
    %p185 = scmp.eq.s32.totalorder %s23, 1
    %p186 = por %p184, %p185
    %p187 = scmp.ne.s32.totalorder %s179, %s182
    %p188 = scmp.eq.s32.totalorder %s23, 0
    %p189 = por %p187, %p188
    %p190 = scmp.ne.s32.totalorder %s179, %s182
    %p191 = scmp.eq.s32.totalorder %s28, 1
    %p192 = por %p190, %p191
    %p193 = scmp.ne.s32.totalorder %s182, %s183
    %p194 = scmp.eq.s32.totalorder %s28, 0
    %p195 = por %p193, %p194
    %p196 = scmp.ne.s32.totalorder %s182, %s183
    %p197 = scmp.eq.s32.totalorder %s29, 1
    %p198 = por %p196, %p197
    %p200 = scmp.ne.s32.totalorder %s183, %s199
    %p201 = scmp.eq.s32.totalorder %s29, 0
    %p202 = por %p200, %p201
    %s204 = sadd.s32 %s203, 1
    %p207 = scmp.eq.s32.totalorder %s23, 1
    %p208 = scmp.ne.s32.totalorder %s203, %s205
    %p209 = scmp.eq.s32.totalorder %s23, 0
    %p210 = por %p208, %p209
    %p211 = scmp.ne.s32.totalorder %s203, %s205
    %p212 = scmp.eq.s32.totalorder %s28, 1
    %p213 = por %p211, %p212
    %p214 = scmp.ne.s32.totalorder %s205, %s206
    %p215 = scmp.eq.s32.totalorder %s28, 0
    %p216 = por %p214, %p215
    %p217 = scmp.ne.s32.totalorder %s205, %s206
    %p218 = scmp.eq.s32.totalorder %s29, 1
    %p219 = por %p217, %p218
    %p221 = scmp.ne.s32.totalorder %s206, %s220
    %p222 = scmp.eq.s32.totalorder %s29, 0
    %p223 = por %p221, %p222
    %s225 = sadd.s32 %s224, 1
    %p228 = scmp.eq.s32.totalorder %s23, 1
    %p229 = scmp.ne.s32.totalorder %s224, %s226
    %p230 = scmp.eq.s32.totalorder %s23, 0
    %p231 = por %p229, %p230
    %p232 = scmp.ne.s32.totalorder %s224, %s226
    %p233 = scmp.eq.s32.totalorder %s28, 1
    %p234 = por %p232, %p233
    %p235 = scmp.ne.s32.totalorder %s226, %s227
    %p236 = scmp.eq.s32.totalorder %s28, 0
    %p237 = por %p235, %p236
    %p238 = scmp.ne.s32.totalorder %s226, %s227
    %p239 = scmp.eq.s32.totalorder %s29, 1
    %p240 = por %p238, %p239
    %p242 = scmp.ne.s32.totalorder %s227, %s241
    %p243 = scmp.eq.s32.totalorder %s29, 0
    %p244 = por %p242, %p243
    %s246 = sadd.s32 %s245, 1
    %p249 = scmp.eq.s32.totalorder %s23, 1
    %p250 = scmp.ne.s32.totalorder %s245, %s247
    %p251 = scmp.eq.s32.totalorder %s23, 0
    %p252 = por %p250, %p251
    %p253 = scmp.ne.s32.totalorder %s245, %s247
    %p254 = scmp.eq.s32.totalorder %s28, 1
    %p255 = por %p253, %p254
    %p256 = scmp.ne.s32.totalorder %s247, %s248
    %p257 = scmp.eq.s32.totalorder %s28, 0
    %p258 = por %p256, %p257
    %p259 = scmp.ne.s32.totalorder %s247, %s248
    %p260 = scmp.eq.s32.totalorder %s29, 1
    %p261 = por %p259, %p260
    %p263 = scmp.ne.s32.totalorder %s248, %s262
    %p264 = scmp.eq.s32.totalorder %s29, 0
    %p265 = por %p263, %p264
    %s267 = sadd.s32 %s266, 1
    %p270 = scmp.eq.s32.totalorder %s23, 1
    %p271 = scmp.ne.s32.totalorder %s266, %s268
    %p272 = scmp.eq.s32.totalorder %s23, 0
    %p273 = por %p271, %p272
    %p274 = scmp.ne.s32.totalorder %s266, %s268
    %p275 = scmp.eq.s32.totalorder %s28, 1
    %p276 = por %p274, %p275
    %p277 = scmp.ne.s32.totalorder %s268, %s269
    %p278 = scmp.eq.s32.totalorder %s28, 0
    %p279 = por %p277, %p278
    %p280 = scmp.ne.s32.totalorder %s268, %s269
    %p281 = scmp.eq.s32.totalorder %s29, 1
    %p282 = por %p280, %p281
    %p284 = scmp.ne.s32.totalorder %s269, %s283
    %p285 = scmp.eq.s32.totalorder %s29, 0
    %p286 = por %p284, %p285
    %s288 = sadd.s32 %s287, 1
    %p291 = scmp.eq.s32.totalorder %s23, 1
    %p292 = scmp.ne.s32.totalorder %s287, %s289
    %p293 = scmp.eq.s32.totalorder %s23, 0
    %p294 = por %p292, %p293
    %p295 = scmp.ne.s32.totalorder %s287, %s289
    %p296 = scmp.eq.s32.totalorder %s28, 1
    %p297 = por %p295, %p296
    %p298 = scmp.ne.s32.totalorder %s289, %s290
    %p299 = scmp.eq.s32.totalorder %s28, 0
    %p300 = por %p298, %p299
    %p301 = scmp.ne.s32.totalorder %s289, %s290
    %p302 = scmp.eq.s32.totalorder %s29, 1
    %p303 = por %p301, %p302
    %p305 = scmp.ne.s32.totalorder %s290, %s304
    %p306 = scmp.eq.s32.totalorder %s29, 0
    %p307 = por %p305, %p306
    %s309 = sadd.s32 %s308, 1
    %p312 = scmp.eq.s32.totalorder %s23, 1
    %p313 = scmp.ne.s32.totalorder %s308, %s310
    %p314 = scmp.eq.s32.totalorder %s23, 0
    %p315 = por %p313, %p314
    %p316 = scmp.ne.s32.totalorder %s308, %s310
    %p317 = scmp.eq.s32.totalorder %s28, 1
    %p318 = por %p316, %p317
    %p319 = scmp.ne.s32.totalorder %s310, %s311
    %p320 = scmp.eq.s32.totalorder %s28, 0
    %p321 = por %p319, %p320
    %p322 = scmp.ne.s32.totalorder %s310, %s311
    %p323 = scmp.eq.s32.totalorder %s29, 1
    %p324 = por %p322, %p323
    %p326 = scmp.ne.s32.totalorder %s311, %s325
    %p327 = scmp.eq.s32.totalorder %s29, 0
    %p328 = por %p326, %p327
    %s330 = sadd.s32 %s329, 1
    %p333 = scmp.eq.s32.totalorder %s23, 1
    %p334 = scmp.ne.s32.totalorder %s329, %s331
    %p335 = scmp.eq.s32.totalorder %s23, 0
    %p336 = por %p334, %p335
    %p337 = scmp.ne.s32.totalorder %s329, %s331
    %p338 = scmp.eq.s32.totalorder %s28, 1
    %p339 = por %p337, %p338
    %p340 = scmp.ne.s32.totalorder %s331, %s332
    %p341 = scmp.eq.s32.totalorder %s28, 0
    %p342 = por %p340, %p341
    %p343 = scmp.ne.s32.totalorder %s331, %s332
    %p344 = scmp.eq.s32.totalorder %s29, 1
    %p345 = por %p343, %p344
    %p347 = scmp.ne.s32.totalorder %s332, %s346
    %p348 = scmp.eq.s32.totalorder %s29, 0
    %p349 = por %p347, %p348
    %s351 = sadd.s32 %s350, 1
    %p354 = scmp.eq.s32.totalorder %s23, 1
    %p355 = scmp.ne.s32.totalorder %s350, %s352
    %p356 = scmp.eq.s32.totalorder %s23, 0
    %p357 = por %p355, %p356
    %p358 = scmp.ne.s32.totalorder %s350, %s352
    %p359 = scmp.eq.s32.totalorder %s28, 1
    %p360 = por %p358, %p359
    %p361 = scmp.ne.s32.totalorder %s352, %s353
    %p362 = scmp.eq.s32.totalorder %s28, 0
    %p363 = por %p361, %p362
    %p364 = scmp.ne.s32.totalorder %s352, %s353
    %p365 = scmp.eq.s32.totalorder %s29, 1
    %p366 = por %p364, %p365
    %p368 = scmp.ne.s32.totalorder %s353, %s367
    %p369 = scmp.eq.s32.totalorder %s29, 0
    %p370 = por %p368, %p369
    %s372 = sadd.s32 %s371, 1
    %p375 = scmp.eq.s32.totalorder %s23, 1
    %p376 = scmp.ne.s32.totalorder %s371, %s373
    %p377 = scmp.eq.s32.totalorder %s23, 0
    %p378 = por %p376, %p377
    %p379 = scmp.ne.s32.totalorder %s371, %s373
    %p380 = scmp.eq.s32.totalorder %s28, 1
    %p381 = por %p379, %p380
    %p382 = scmp.ne.s32.totalorder %s373, %s374
    %p383 = scmp.eq.s32.totalorder %s28, 0
    %p384 = por %p382, %p383
    %p385 = scmp.ne.s32.totalorder %s373, %s374
    %p386 = scmp.eq.s32.totalorder %s29, 1
    %p387 = por %p385, %p386
    %p389 = scmp.ne.s32.totalorder %s374, %s388
    %p390 = scmp.eq.s32.totalorder %s29, 0
    %p391 = por %p389, %p390
    %s392 = ssub.s32 %s30, %s42
    %s393 = ssub.s32 %s31, %s38
    %s394 = sor.u32 %s392, %s393
    %p395 = scmp.eq.s32.totalorder %s394, 0
    %s397 = sadd.s32 %s396, 1
    %s398 = scalar_select %p395, %s396, %s397
    %p401 = pneg %p395
    %p402 = scmp.eq.s32.totalorder %s23, 1
    %p403 = por %p401, %p402
    %p404 = scmp.ne.s32.totalorder %s396, %s399
    %p405 = scmp.eq.s32.totalorder %s23, 0
    %p406 = por %p404, %p405
    %p407 = scmp.ne.s32.totalorder %s396, %s399
    %p408 = scmp.eq.s32.totalorder %s28, 1
    %p409 = por %p407, %p408
    %p410 = scmp.ne.s32.totalorder %s399, %s400
    %p411 = scmp.eq.s32.totalorder %s28, 0
    %p412 = por %p410, %p411
    %p413 = scmp.ne.s32.totalorder %s399, %s400
    %p414 = scmp.eq.s32.totalorder %s29, 1
    %p415 = por %p413, %p414
    %p417 = scmp.ne.s32.totalorder %s400, %s416
    %p418 = scmp.eq.s32.totalorder %s29, 0
    %p419 = por %p417, %p418
    %s420 = ssub.s32 %s30, %s42
    %s421 = ssub.s32 %s31, %s38
    %s422 = sor.u32 %s420, %s421
    %p423 = scmp.eq.s32.totalorder %s422, 0
    %s425 = sadd.s32 %s424, 1
    %s426 = scalar_select %p423, %s424, %s425
    %p429 = pneg %p423
    %p430 = scmp.eq.s32.totalorder %s23, 1
    %p431 = por %p429, %p430
    %p432 = scmp.ne.s32.totalorder %s424, %s427
    %p433 = scmp.eq.s32.totalorder %s23, 0
    %p434 = por %p432, %p433
    %p435 = scmp.ne.s32.totalorder %s424, %s427
    %p436 = scmp.eq.s32.totalorder %s28, 1
    %p437 = por %p435, %p436
    %p438 = scmp.ne.s32.totalorder %s427, %s428
    %p439 = scmp.eq.s32.totalorder %s28, 0
    %p440 = por %p438, %p439
    %p441 = scmp.ne.s32.totalorder %s427, %s428
    %p442 = scmp.eq.s32.totalorder %s29, 1
    %p443 = por %p441, %p442
    %p445 = scmp.ne.s32.totalorder %s428, %s444
    %p446 = scmp.eq.s32.totalorder %s29, 0
    %p447 = por %p445, %p446
    %p448 = scmp.le.s32.totalorder 1, %s23
    %p449 = scmp.lt.s32.totalorder %s23, 3
    %p450 = pnand %p448, %p449
    %p451 = pneg %p450
    // Predicated region
    $region9: #{_lambda_.5} parent=5 // pred_check
      _
    $region10: #{_lambda_.5} parent=5 // pred_check_branch
      %453 = sbr.rel (%p450) target = $region12
    $region11: #{_lambda_.5} parent=5 // pred_region
      %s454 = ssub.s32 %s23, 1
      // Predicated region
      $region13: #{_lambda_.5} parent=11 // pred_check
        %p455 = pneg %p216
      $region14: #{_lambda_.5} parent=11 // pred_check_branch
        %457 = sbr.rel (%p455) target = $region16
      $region15: #{_lambda_.5} parent=11 // pred_region
        _
      $region16: #{_lambda_.5} parent=11 // pred_fallthru
        _
      // Predicated region
      $region17: #{_lambda_.5} parent=11 // pred_check
        %p458 = pneg %p237
      $region18: #{_lambda_.5} parent=11 // pred_check_branch
        %460 = sbr.rel (%p458) target = $region20
      $region19: #{_lambda_.5} parent=11 // pred_region
        _
      $region20: #{_lambda_.5} parent=11 // pred_fallthru
        _
      // Predicated region
      $region21: #{_lambda_.5} parent=11 // pred_check
        %p461 = pneg %p258
      $region22: #{_lambda_.5} parent=11 // pred_check_branch
        %463 = sbr.rel (%p461) target = $region24
      $region23: #{_lambda_.5} parent=11 // pred_region
        _
      $region24: #{_lambda_.5} parent=11 // pred_fallthru
        _
      // Predicated region
      $region25: #{_lambda_.5} parent=11 // pred_check
        %p464 = pneg %p279
      $region26: #{_lambda_.5} parent=11 // pred_check_branch
        %466 = sbr.rel (%p464) target = $region28
      $region27: #{_lambda_.5} parent=11 // pred_region
        _
      $region28: #{_lambda_.5} parent=11 // pred_fallthru
        _
      // Predicated region
      $region29: #{_lambda_.5} parent=11 // pred_check
        %p467 = pneg %p300
      $region30: #{_lambda_.5} parent=11 // pred_check_branch
        %469 = sbr.rel (%p467) target = $region32
      $region31: #{_lambda_.5} parent=11 // pred_region
        _
      $region32: #{_lambda_.5} parent=11 // pred_fallthru
        _
      // Predicated region
      $region33: #{_lambda_.5} parent=11 // pred_check
        %p470 = pneg %p321
      $region34: #{_lambda_.5} parent=11 // pred_check_branch
        %472 = sbr.rel (%p470) target = $region36
      $region35: #{_lambda_.5} parent=11 // pred_region
        _
      $region36: #{_lambda_.5} parent=11 // pred_fallthru
        _
      // Predicated region
      $region37: #{_lambda_.5} parent=11 // pred_check
        %p473 = pneg %p342
      $region38: #{_lambda_.5} parent=11 // pred_check_branch
        %475 = sbr.rel (%p473) target = $region40
      $region39: #{_lambda_.5} parent=11 // pred_region
        _
      $region40: #{_lambda_.5} parent=11 // pred_fallthru
        _
      // Predicated region
      $region41: #{_lambda_.5} parent=11 // pred_check
        %p476 = pneg %p363
      $region42: #{_lambda_.5} parent=11 // pred_check_branch
        %478 = sbr.rel (%p476) target = $region44
      $region43: #{_lambda_.5} parent=11 // pred_region
        _
      $region44: #{_lambda_.5} parent=11 // pred_fallthru
        _
      // Predicated region
      $region45: #{_lambda_.5} parent=11 // pred_check
        %p479 = pneg %p384
      $region46: #{_lambda_.5} parent=11 // pred_check_branch
        %481 = sbr.rel (%p479) target = $region48
      $region47: #{_lambda_.5} parent=11 // pred_region
        _
      $region48: #{_lambda_.5} parent=11 // pred_fallthru
        _
    $region12: #{_lambda_.5} parent=5 // pred_fallthru
      _
    %p482 = scmp.lt.s32.totalorder %s23, 2
    // Predicated region
    $region49: #{_lambda_.5} parent=5 // pred_check
      %p483 = pneg %p482
    $region50: #{_lambda_.5} parent=5 // pred_check_branch
      %485 = sbr.rel (%p483) target = $region52
    $region51: #{_lambda_.5} parent=5 // pred_region
      // Predicated region
      $region53: #{_lambda_.5} parent=51 // pred_check
        %p486 = pneg %p57
      $region54: #{_lambda_.5} parent=51 // pred_check_branch
        %488 = sbr.rel (%p486) target = $region56
      $region55: #{_lambda_.5} parent=51 // pred_region
        %s489 = smul.u32 2, %s31
        %p490 = scmp.lt.s32.totalorder %s30, 1
        %s491 = scalar_select %p490, %s30, 1
        %p492 = scmp.lt.s32.totalorder %s489, 1
        %s493 = scalar_select %p492, %s489, 1
        %s494 = smul.addr %s491, 2
        %s495 = sadd.s32 %s493, %s494
        %s496 = smul.addr %s495, 4
        %s497 = scalar_lea.vmem %s0, %s496
        %s498 = smul.u32 2, %s31
      $region56: #{_lambda_.5} parent=51 // pred_fallthru
        _
      // Predicated region
      $region57: #{_lambda_.5} parent=51 // pred_check
        %p499 = pneg %p85
      $region58: #{_lambda_.5} parent=51 // pred_check_branch
        %501 = sbr.rel (%p499) target = $region60
      $region59: #{_lambda_.5} parent=51 // pred_region
        %s502 = smul.u32 2, %s31
        %p503 = scmp.lt.s32.totalorder %s30, 1
        %s504 = scalar_select %p503, %s30, 1
        %p505 = scmp.lt.s32.totalorder %s502, 1
        %s506 = scalar_select %p505, %s502, 1
        %s507 = smul.addr %s504, 2
        %s508 = sadd.s32 %s506, %s507
        %s509 = smul.addr %s508, 4
        %s510 = scalar_lea.vmem %s1, %s509
        %s511 = smul.u32 2, %s31
      $region60: #{_lambda_.5} parent=51 // pred_fallthru
        _
      // Predicated region
      $region61: #{_lambda_.5} parent=51 // pred_check
        %p512 = pneg %p111
      $region62: #{_lambda_.5} parent=51 // pred_check_branch
        %514 = sbr.rel (%p512) target = $region64
      $region63: #{_lambda_.5} parent=51 // pred_region
        %p515 = scmp.lt.s32.totalorder %s30, 1
        %s516 = scalar_select %p515, %s30, 1
        %s517 = smul.addr %s516, 4
        %s518 = scalar_lea.vmem %s2, %s517
      $region64: #{_lambda_.5} parent=51 // pred_fallthru
        _
      // Predicated region
      $region65: #{_lambda_.5} parent=51 // pred_check
        %p519 = pneg %p137
      $region66: #{_lambda_.5} parent=51 // pred_check_branch
        %521 = sbr.rel (%p519) target = $region68
      $region67: #{_lambda_.5} parent=51 // pred_region
        %p522 = scmp.lt.s32.totalorder %s30, 1
        %s523 = scalar_select %p522, %s30, 1
        %s524 = smul.addr %s523, 4
        %s525 = scalar_lea.vmem %s3, %s524
      $region68: #{_lambda_.5} parent=51 // pred_fallthru
        _
      // Predicated region
      $region69: #{_lambda_.5} parent=51 // pred_check
        %p526 = pneg %p163
      $region70: #{_lambda_.5} parent=51 // pred_check_branch
        %528 = sbr.rel (%p526) target = $region72
      $region71: #{_lambda_.5} parent=51 // pred_region
        %p529 = scmp.lt.s32.totalorder %s30, 1
        %s530 = scalar_select %p529, %s30, 1
        %s531 = smul.addr %s530, 4
        %s532 = scalar_lea.vmem %s4, %s531
      $region72: #{_lambda_.5} parent=51 // pred_fallthru
        _
      // Predicated region
      $region73: #{_lambda_.5} parent=51 // pred_check
        %p533 = pneg %p189
      $region74: #{_lambda_.5} parent=51 // pred_check_branch
        %535 = sbr.rel (%p533) target = $region76
      $region75: #{_lambda_.5} parent=51 // pred_region
        %p536 = scmp.lt.s32.totalorder %s30, 1
        %s537 = scalar_select %p536, %s30, 1
        %s538 = smul.addr %s537, 4
        %s539 = scalar_lea.vmem %s5, %s538
      $region76: #{_lambda_.5} parent=51 // pred_fallthru
        _
    $region52: #{_lambda_.5} parent=5 // pred_fallthru
      _
    %p540 = scmp.le.s32.totalorder 1, %s23
    %p541 = scmp.lt.s32.totalorder %s23, 3
    %p542 = pnand %p540, %p541
    %p543 = pneg %p542
    // Predicated region
    $region77: #{_lambda_.5} parent=5 // pred_check
      _
    $region78: #{_lambda_.5} parent=5 // pred_check_branch
      %545 = sbr.rel (%p542) target = $region80
    $region79: #{_lambda_.5} parent=5 // pred_region
      %s546 = ssub.s32 %s23, 1
      %s547 = smul.u32 2, %s33
      %p548 = scmp.lt.s32.totalorder %s32, 1
      %s549 = scalar_select %p548, %s32, 1
      %p550 = scmp.lt.s32.totalorder %s547, 1
      %s551 = scalar_select %p550, %s547, 1
      %s552 = smul.addr %s549, 2
      %s553 = sadd.s32 %s551, %s552
      %s554 = smul.addr %s553, 4
      %s555 = scalar_lea.vmem %s0, %s554
      %p556 = pneg %p63
      %p557 = pneg %p60
      %s558 = smul.u32 2, %s33
      %p559 = scmp.lt.s32.totalorder %s32, 1
      %s560 = scalar_select %p559, %s32, 1
      %p561 = scmp.lt.s32.totalorder %s558, 1
      %s562 = scalar_select %p561, %s558, 1
      %s563 = smul.addr %s560, 2
      %s564 = sadd.s32 %s562, %s563
      %s565 = smul.addr %s564, 4
      %s566 = scalar_lea.vmem %s1, %s565
      %p567 = pneg %p91
      %p568 = pneg %p88
      %p569 = scmp.lt.s32.totalorder %s32, 1
      %s570 = scalar_select %p569, %s32, 1
      %s571 = smul.addr %s570, 4
      %s572 = scalar_lea.vmem %s2, %s571
      %p573 = pneg %p117
      %p574 = pneg %p114
      %p575 = scmp.lt.s32.totalorder %s32, 1
      %s576 = scalar_select %p575, %s32, 1
      %s577 = smul.addr %s576, 4
      %s578 = scalar_lea.vmem %s3, %s577
      %p579 = pneg %p143
      %p580 = pneg %p140
      %p581 = scmp.lt.s32.totalorder %s32, 1
      %s582 = scalar_select %p581, %s32, 1
      %s583 = smul.addr %s582, 4
      %s584 = scalar_lea.vmem %s4, %s583
      %p585 = pneg %p169
      %p586 = pneg %p166
      %p587 = scmp.lt.s32.totalorder %s32, 1
      %s588 = scalar_select %p587, %s32, 1
      %s589 = smul.addr %s588, 4
      %s590 = scalar_lea.vmem %s5, %s589
      %p591 = pneg %p195
      %p592 = pneg %p192
      %p593 = pneg %p216
      %p594 = pneg %p213
      %p595 = pneg %p237
      %p596 = pneg %p234
      %p597 = pneg %p258
      %p598 = pneg %p255
      %p599 = pneg %p279
      %p600 = pneg %p276
      %p601 = pneg %p300
      %p602 = pneg %p297
      %p603 = pneg %p321
      %p604 = pneg %p318
      %p605 = pneg %p342
      %p606 = pneg %p339
      %p607 = pneg %p363
      %p608 = pneg %p360
      %p609 = pneg %p384
      %p610 = pneg %p381
      %p611 = pneg %p412
      %p612 = pneg %p409
      %p613 = scmp.lt.s32.totalorder %s32, 1
      %s614 = scalar_select %p613, %s32, 1
      %p615 = scmp.lt.s32.totalorder %s33, 0
      %s616 = scalar_select %p615, %s33, 0
      %s617 = sadd.s32 %s616, %s614
      %s618 = smul.addr %s617, 4
      %s619 = scalar_lea.vmem %s15, %s618
      %p620 = pneg %p440
      %p621 = pneg %p437
      %p622 = scmp.lt.s32.totalorder %s32, 1
      %s623 = scalar_select %p622, %s32, 1
      %p624 = scmp.lt.s32.totalorder %s33, 0
      %s625 = scalar_select %p624, %s33, 0
      %s626 = sadd.s32 %s625, %s623
      %s627 = smul.addr %s626, 4
      %s628 = scalar_lea.vmem %s16, %s627
      %s629 = smul.u32 2, %s33
      %p630 = scmp.lt.s32.totalorder %s32, 1
      %s631 = scalar_select %p630, %s32, 1
      %p632 = scmp.lt.s32.totalorder %s629, 1
      %s633 = scalar_select %p632, %s629, 1
      %s634 = smul.addr %s631, 2
      %s635 = sadd.s32 %s633, %s634
      %s636 = smul.addr %s635, 4
      %s637 = scalar_lea.vmem %s0, %s636
      %s638 = smul.u32 2, %s33
      %s639 = smul.u32 2, %s33
      %p640 = scmp.lt.s32.totalorder %s32, 1
      %s641 = scalar_select %p640, %s32, 1
      %p642 = scmp.lt.s32.totalorder %s639, 1
      %s643 = scalar_select %p642, %s639, 1
      %s644 = smul.addr %s641, 2
      %s645 = sadd.s32 %s643, %s644
      %s646 = smul.addr %s645, 4
      %s647 = scalar_lea.vmem %s1, %s646
      %s648 = smul.u32 2, %s33
      %p649 = scmp.lt.s32.totalorder %s32, 1
      %s650 = scalar_select %p649, %s32, 1
      %s651 = smul.addr %s650, 4
      %s652 = scalar_lea.vmem %s2, %s651
      %p653 = scmp.lt.s32.totalorder %s32, 1
      %s654 = scalar_select %p653, %s32, 1
      %s655 = smul.addr %s654, 4
      %s656 = scalar_lea.vmem %s3, %s655
      %p657 = scmp.lt.s32.totalorder %s32, 1
      %s658 = scalar_select %p657, %s32, 1
      %s659 = smul.addr %s658, 4
      %s660 = scalar_lea.vmem %s4, %s659
      %p661 = scmp.lt.s32.totalorder %s32, 1
      %s662 = scalar_select %p661, %s32, 1
      %s663 = smul.addr %s662, 4
      %s664 = scalar_lea.vmem %s5, %s663
      %p665 = scmp.lt.s32.totalorder %s32, 1
      %s666 = scalar_select %p665, %s32, 1
      %p667 = scmp.lt.s32.totalorder %s33, 0
      %s668 = scalar_select %p667, %s33, 0
      %s669 = sadd.s32 %s668, %s666
      %s670 = smul.addr %s669, 4
      %s671 = scalar_lea.vmem %s15, %s670
      %p672 = scmp.lt.s32.totalorder %s32, 1
      %s673 = scalar_select %p672, %s32, 1
      %p674 = scmp.lt.s32.totalorder %s33, 0
      %s675 = scalar_select %p674, %s33, 0
      %s676 = sadd.s32 %s675, %s673
      %s677 = smul.addr %s676, 4
      %s678 = scalar_lea.vmem %s16, %s677
      %v680 = vld [vmem:[%s6] sm:$0xf]
      %v681 = vld [vmem:[%s6 + $0x4] sm:$0xf]
      %v682 = vld [vmem:[%s6 + $0x8] sm:$0xf]
      %v683 = vld [vmem:[%s6 + $0xc] sm:$0xf]
      %v684 = vld [vmem:[%s7] sm:$0xf]
      %v685 = vld [vmem:[%s7 + $0x4] sm:$0xf]
      %v686 = vld [vmem:[%s7 + $0x8] sm:$0xf]
      %v687 = vld [vmem:[%s7 + $0xc] sm:$0xf]
      %v688 = vld [vmem:[%s8] sm:$0x1]
      %v689 = vld [vmem:[%s637] sm:$0xf]
      %v690 = vld [vmem:[%s637 + $0x4] sm:$0xf]
      %v691 = vld [vmem:[%s647] sm:$0xf]
      %v692 = vld [vmem:[%s647 + $0x4] sm:$0xf]
      %v693 = vadd.bf16 %v689, %v691
      %v694 = vadd.bf16 %v690, %v692
      %v695 = vmul.bf16 %v689, %v691
      %v696 = vmul.bf16 %v690, %v692
      %v699 = vunpack.c.l.b16 %v695
      %v700 = vunpack.c.l.b16 %v696
      %v701 = vpack.c.b16 %v700, %v699
      %v706 = vunpack.c.l.b16 %v684
      %v707 = vunpack.c.l.b16 %v685
      %v708 = vunpack.c.l.b16 %v686
      %v709 = vunpack.c.l.b16 %v687
      %v710 = vpack.c.b16 %v707, %v706
      %v711 = vpack.c.b16 %v709, %v708
      %vm714 = vcmask 261120
      %v716 = vsel %vm714, %v701, 0
      %718 = vmatprep.subr.bf16.mxu0 0
      %719 = vmatpush1.bf16.msra.mxu0 %v710
      %720 = vmatprep.subr.bf16.mxu0 0
      %721 = vmatpush1.bf16.msra.mxu0 %v711
      %722 = vmatprep.subr.bf16.mxu0 0
      %723 = vmatpush1.bf16.msra.mxu0 0
      %724 = vmatprep.subr.bf16.mxu0 0
      %725 = vmatpush1.bf16.msra.mxu0 0
      %726 = vmatprep.subr.bf16.mxu0 0
      %727 = vmatpush1.bf16.msra.mxu0 0
      %728 = vmatprep.subr.bf16.mxu0 0
      %729 = vmatpush1.bf16.msra.mxu0 0
      %730 = vmatprep.subr.bf16.mxu0 0
      %731 = vmatpush1.bf16.msra.mxu0 0
      %732 = vmatprep.subr.bf16.mxu0 0
      %733 = vmatpush1.bf16.msra.mxu0 0
      %734 = vmatprep.subr.bf16.mxu0 0
      %735 = vmatpush1.bf16.msra.mxu0 0
      %736 = vmatprep.subr.bf16.mxu0 0
      %737 = vmatpush1.bf16.msra.mxu0 0
      %738 = vmatprep.subr.bf16.mxu0 0
      %739 = vmatpush1.bf16.msra.mxu0 0
      %740 = vmatprep.subr.bf16.mxu0 0
      %741 = vmatpush1.bf16.msra.mxu0 0
      %742 = vmatprep.subr.bf16.mxu0 0
      %743 = vmatpush1.bf16.msra.mxu0 0
      %744 = vmatprep.subr.bf16.mxu0 0
      %745 = vmatpush1.bf16.msra.mxu0 0
      %746 = vmatprep.subr.bf16.mxu0 0
      %747 = vmatpush1.bf16.msra.mxu0 0
      %748 = vmatprep.subr.bf16.mxu0 0
      %749 = vmatpush1.bf16.msra.mxu0 0
      %750 = vmatprep.mubr.bf16.mxu0 0
      %751 = vmatmul.mubr.bf16.gmra.mrb[0].mxu0 %v716
      %v752 = vpop.f32.mrb[0].mxu0
      %v753 = vadd.f32 0.0, %v752
      %v754 = vpop.f32.mrb[0].mxu0
      %v755 = vpop.f32.mrb[0].mxu0
      %v756 = vadd.f32 0.0, %v755
      %v757 = vpop.f32.mrb[0].mxu0
      %758 = vdwg.mxu0
      %v761 = vunpack.c.l.b16 %v693
      %v762 = vunpack.c.l.b16 %v694
      %v763 = vpack.c.b16 %v762, %v761
      %v768 = vunpack.c.l.b16 %v680
      %v769 = vunpack.c.l.b16 %v681
      %v770 = vunpack.c.l.b16 %v682
      %v771 = vunpack.c.l.b16 %v683
      %v772 = vpack.c.b16 %v769, %v768
      %v773 = vpack.c.b16 %v771, %v770
      %v777 = vsel %vm714, %v763, 0
      %779 = vmatprep.subr.bf16.mxu0 0
      %780 = vmatpush1.bf16.msra.mxu0 %v772
      %781 = vmatprep.subr.bf16.mxu0 0
      %782 = vmatpush1.bf16.msra.mxu0 %v773
      %783 = vmatprep.subr.bf16.mxu0 0
      %784 = vmatpush1.bf16.msra.mxu0 0
      %785 = vmatprep.subr.bf16.mxu0 0
      %786 = vmatpush1.bf16.msra.mxu0 0
      %787 = vmatprep.subr.bf16.mxu0 0
      %788 = vmatpush1.bf16.msra.mxu0 0
      %789 = vmatprep.subr.bf16.mxu0 0
      %790 = vmatpush1.bf16.msra.mxu0 0
      %791 = vmatprep.subr.bf16.mxu0 0
      %792 = vmatpush1.bf16.msra.mxu0 0
      %793 = vmatprep.subr.bf16.mxu0 0
      %794 = vmatpush1.bf16.msra.mxu0 0
      %795 = vmatprep.subr.bf16.mxu0 0
      %796 = vmatpush1.bf16.msra.mxu0 0
      %797 = vmatprep.subr.bf16.mxu0 0
      %798 = vmatpush1.bf16.msra.mxu0 0
      %799 = vmatprep.subr.bf16.mxu0 0
      %800 = vmatpush1.bf16.msra.mxu0 0
      %801 = vmatprep.subr.bf16.mxu0 0
      %802 = vmatpush1.bf16.msra.mxu0 0
      %803 = vmatprep.subr.bf16.mxu0 0
      %804 = vmatpush1.bf16.msra.mxu0 0
      %805 = vmatprep.subr.bf16.mxu0 0
      %806 = vmatpush1.bf16.msra.mxu0 0
      %807 = vmatprep.subr.bf16.mxu0 0
      %808 = vmatpush1.bf16.msra.mxu0 0
      %809 = vmatprep.subr.bf16.mxu0 0
      %810 = vmatpush1.bf16.msra.mxu0 0
      %811 = vmatprep.mubr.bf16.mxu0 0
      %812 = vmatmul.mubr.bf16.gmra.mrb[0].mxu0 %v777
      %v813 = vpop.f32.mrb[0].mxu0
      %v814 = vadd.f32 %v753, %v813
      %v815 = vpop.f32.mrb[0].mxu0
      %v816 = vpop.f32.mrb[0].mxu0
      %v817 = vadd.f32 %v756, %v816
      %v818 = vpop.f32.mrb[0].mxu0
      %819 = vdwg.mxu0
      %v821 = vlaneseq
      %v822 = vshrl.u32 %v821, 7
      %v823 = vsub.s32 0, %v822
      %v824 = vrot.slane %v688, %v823
      %v826 = vadd.f32 %v814, %v824
      %v827 = vadd.f32 %v817, %v824
      %v828 = vld [vmem:[%s652] sm:$0xf]
      %v829 = vld [vmem:[%s656] sm:$0xf]
      %v830 = vadd.bf16 %v828, %v829
      %v831 = vmul.bf16 %v828, %v829
      %v833 = vsel %vm714, %v831, 0
      %835 = vmatprep.subr.bf16.mxu0 0
      %836 = vmatpush1.bf16.msra.mxu0 %v710
      %837 = vmatprep.subr.bf16.mxu0 0
      %838 = vmatpush1.bf16.msra.mxu0 %v711
      %839 = vmatprep.subr.bf16.mxu0 0
      %840 = vmatpush1.bf16.msra.mxu0 0
      %841 = vmatprep.subr.bf16.mxu0 0
      %842 = vmatpush1.bf16.msra.mxu0 0
      %843 = vmatprep.subr.bf16.mxu0 0
      %844 = vmatpush1.bf16.msra.mxu0 0
      %845 = vmatprep.subr.bf16.mxu0 0
      %846 = vmatpush1.bf16.msra.mxu0 0
      %847 = vmatprep.subr.bf16.mxu0 0
      %848 = vmatpush1.bf16.msra.mxu0 0
      %849 = vmatprep.subr.bf16.mxu0 0
      %850 = vmatpush1.bf16.msra.mxu0 0
      %851 = vmatprep.subr.bf16.mxu0 0
      %852 = vmatpush1.bf16.msra.mxu0 0
      %853 = vmatprep.subr.bf16.mxu0 0
      %854 = vmatpush1.bf16.msra.mxu0 0
      %855 = vmatprep.subr.bf16.mxu0 0
      %856 = vmatpush1.bf16.msra.mxu0 0
      %857 = vmatprep.subr.bf16.mxu0 0
      %858 = vmatpush1.bf16.msra.mxu0 0
      %859 = vmatprep.subr.bf16.mxu0 0
      %860 = vmatpush1.bf16.msra.mxu0 0
      %861 = vmatprep.subr.bf16.mxu0 0
      %862 = vmatpush1.bf16.msra.mxu0 0
      %863 = vmatprep.subr.bf16.mxu0 0
      %864 = vmatpush1.bf16.msra.mxu0 0
      %865 = vmatprep.subr.bf16.mxu0 0
      %866 = vmatpush1.bf16.msra.mxu0 0
      %867 = vmatprep.mubr.bf16.mxu0 0
      %868 = vmatmul.mubr.bf16.gmra.mrb[0].mxu0 %v833
      %v869 = vpop.f32.mrb[0].mxu0
      %v870 = vadd.f32 0.0, %v869
      %v871 = vpop.f32.mrb[0].mxu0
      %v872 = vpop.f32.mrb[0].mxu0
      %v873 = vpop.f32.mrb[0].mxu0
      %874 = vdwg.mxu0
      %v876 = vsel %vm714, %v830, 0
      %878 = vmatprep.subr.bf16.mxu0 0
      %879 = vmatpush1.bf16.msra.mxu0 %v772
      %880 = vmatprep.subr.bf16.mxu0 0
      %881 = vmatpush1.bf16.msra.mxu0 %v773
      %882 = vmatprep.subr.bf16.mxu0 0
      %883 = vmatpush1.bf16.msra.mxu0 0
      %884 = vmatprep.subr.bf16.mxu0 0
      %885 = vmatpush1.bf16.msra.mxu0 0
      %886 = vmatprep.subr.bf16.mxu0 0
      %887 = vmatpush1.bf16.msra.mxu0 0
      %888 = vmatprep.subr.bf16.mxu0 0
      %889 = vmatpush1.bf16.msra.mxu0 0
      %890 = vmatprep.subr.bf16.mxu0 0
      %891 = vmatpush1.bf16.msra.mxu0 0
      %892 = vmatprep.subr.bf16.mxu0 0
      %893 = vmatpush1.bf16.msra.mxu0 0
      %894 = vmatprep.subr.bf16.mxu0 0
      %895 = vmatpush1.bf16.msra.mxu0 0
      %896 = vmatprep.subr.bf16.mxu0 0
      %897 = vmatpush1.bf16.msra.mxu0 0
      %898 = vmatprep.subr.bf16.mxu0 0
      %899 = vmatpush1.bf16.msra.mxu0 0
      %900 = vmatprep.subr.bf16.mxu0 0
      %901 = vmatpush1.bf16.msra.mxu0 0
      %902 = vmatprep.subr.bf16.mxu0 0
      %903 = vmatpush1.bf16.msra.mxu0 0
      %904 = vmatprep.subr.bf16.mxu0 0
      %905 = vmatpush1.bf16.msra.mxu0 0
      %906 = vmatprep.subr.bf16.mxu0 0
      %907 = vmatpush1.bf16.msra.mxu0 0
      %908 = vmatprep.subr.bf16.mxu0 0
      %909 = vmatpush1.bf16.msra.mxu0 0
      %910 = vmatprep.mubr.bf16.mxu0 0
      %911 = vmatmul.mubr.bf16.gmra.mrb[0].mxu0 %v876
      %v912 = vpop.f32.mrb[0].mxu0
      %v913 = vadd.f32 %v870, %v912
      %v914 = vpop.f32.mrb[0].mxu0
      %v915 = vpop.f32.mrb[0].mxu0
      %v916 = vpop.f32.mrb[0].mxu0
      %917 = vdwg.mxu0
      %v918 = vadd.f32 %v913, %v824
      %v919 = vpack.c.bf16 %v918, %v918
      %v920 = vld [vmem:[%s660] sm:$0xf]
      %v921 = vld [vmem:[%s664] sm:$0xf]
      %v922 = vadd.bf16 %v920, %v921
      %v923 = vmul.bf16 %v920, %v921
      %v925 = vsel %vm714, %v923, 0
      %927 = vmatprep.subr.bf16.mxu0 0
      %928 = vmatpush1.bf16.msra.mxu0 %v710
      %929 = vmatprep.subr.bf16.mxu0 0
      %930 = vmatpush1.bf16.msra.mxu0 %v711
      %931 = vmatprep.subr.bf16.mxu0 0
      %932 = vmatpush1.bf16.msra.mxu0 0
      %933 = vmatprep.subr.bf16.mxu0 0
      %934 = vmatpush1.bf16.msra.mxu0 0
      %935 = vmatprep.subr.bf16.mxu0 0
      %936 = vmatpush1.bf16.msra.mxu0 0
      %937 = vmatprep.subr.bf16.mxu0 0
      %938 = vmatpush1.bf16.msra.mxu0 0
      %939 = vmatprep.subr.bf16.mxu0 0
      %940 = vmatpush1.bf16.msra.mxu0 0
      %941 = vmatprep.subr.bf16.mxu0 0
      %942 = vmatpush1.bf16.msra.mxu0 0
      %943 = vmatprep.subr.bf16.mxu0 0
      %944 = vmatpush1.bf16.msra.mxu0 0
      %945 = vmatprep.subr.bf16.mxu0 0
      %946 = vmatpush1.bf16.msra.mxu0 0
      %947 = vmatprep.subr.bf16.mxu0 0
      %948 = vmatpush1.bf16.msra.mxu0 0
      %949 = vmatprep.subr.bf16.mxu0 0
      %950 = vmatpush1.bf16.msra.mxu0 0
      %951 = vmatprep.subr.bf16.mxu0 0
      %952 = vmatpush1.bf16.msra.mxu0 0
      %953 = vmatprep.subr.bf16.mxu0 0
      %954 = vmatpush1.bf16.msra.mxu0 0
      %955 = vmatprep.subr.bf16.mxu0 0
      %956 = vmatpush1.bf16.msra.mxu0 0
      %957 = vmatprep.subr.bf16.mxu0 0
      %958 = vmatpush1.bf16.msra.mxu0 0
      %959 = vmatprep.mubr.bf16.mxu0 0
      %960 = vmatmul.mubr.bf16.gmra.mrb[0].mxu0 %v925
      %v961 = vpop.f32.mrb[0].mxu0
      %v962 = vadd.f32 0.0, %v961
      %v963 = vpop.f32.mrb[0].mxu0
      %v964 = vpop.f32.mrb[0].mxu0
      %v965 = vpop.f32.mrb[0].mxu0
      %966 = vdwg.mxu0
      %v968 = vsel %vm714, %v922, 0
      %970 = vmatprep.subr.bf16.mxu0 0
      %971 = vmatpush1.bf16.msra.mxu0 %v772
      %972 = vmatprep.subr.bf16.mxu0 0
      %973 = vmatpush1.bf16.msra.mxu0 %v773
      %974 = vmatprep.subr.bf16.mxu0 0
      %975 = vmatpush1.bf16.msra.mxu0 0
      %976 = vmatprep.subr.bf16.mxu0 0
      %977 = vmatpush1.bf16.msra.mxu0 0
      %978 = vmatprep.subr.bf16.mxu0 0
      %979 = vmatpush1.bf16.msra.mxu0 0
      %980 = vmatprep.subr.bf16.mxu0 0
      %981 = vmatpush1.bf16.msra.mxu0 0
      %982 = vmatprep.subr.bf16.mxu0 0
      %983 = vmatpush1.bf16.msra.mxu0 0
      %984 = vmatprep.subr.bf16.mxu0 0
      %985 = vmatpush1.bf16.msra.mxu0 0
      %986 = vmatprep.subr.bf16.mxu0 0
      %987 = vmatpush1.bf16.msra.mxu0 0
      %988 = vmatprep.subr.bf16.mxu0 0
      %989 = vmatpush1.bf16.msra.mxu0 0
      %990 = vmatprep.subr.bf16.mxu0 0
      %991 = vmatpush1.bf16.msra.mxu0 0
      %992 = vmatprep.subr.bf16.mxu0 0
      %993 = vmatpush1.bf16.msra.mxu0 0
      %994 = vmatprep.subr.bf16.mxu0 0
      %995 = vmatpush1.bf16.msra.mxu0 0
      %996 = vmatprep.subr.bf16.mxu0 0
      %997 = vmatpush1.bf16.msra.mxu0 0
      %998 = vmatprep.subr.bf16.mxu0 0
      %999 = vmatpush1.bf16.msra.mxu0 0
      %1000 = vmatprep.subr.bf16.mxu0 0
      %1001 = vmatpush1.bf16.msra.mxu0 0
      %1002 = vmatprep.mubr.bf16.mxu0 0
      %1003 = vmatmul.mubr.bf16.gmra.mrb[0].mxu0 %v968
      %v1004 = vpop.f32.mrb[0].mxu0
      %v1005 = vadd.f32 %v962, %v1004
      %v1006 = vpop.f32.mrb[0].mxu0
      %v1007 = vpop.f32.mrb[0].mxu0
      %v1008 = vpop.f32.mrb[0].mxu0
      %1009 = vdwg.mxu0
      %v1010 = vadd.f32 %v1005, %v824
      %v1011 = vpack.c.bf16 %v1010, %v1010
      %v1012 = vpack.c.bf16 %v827, %v826
      %v1014 = vsel %vm714, %v919, 0
      %v1017 = vsel %vm714, %v1012, 0
      %1019 = vmatprep.subr.bf16.mxu0 0
      %1020 = vmatpush1.bf16.xpose.msra.mxu0 %v1017
      %1021 = vmatprep.subr.bf16.mxu0 0
      %1022 = vmatpush1.bf16.xpose.msra.mxu0 0
      %1023 = vmatprep.subr.bf16.mxu0 0
      %1024 = vmatpush1.bf16.xpose.msra.mxu0 0
      %1025 = vmatprep.subr.bf16.mxu0 0
      %1026 = vmatpush1.bf16.xpose.msra.mxu0 0
      %1027 = vmatprep.subr.bf16.mxu0 0
      %1028 = vmatpush1.bf16.xpose.msra.mxu0 0
      %1029 = vmatprep.subr.bf16.mxu0 0
      %1030 = vmatpush1.bf16.xpose.msra.mxu0 0
      %1031 = vmatprep.subr.bf16.mxu0 0
      %1032 = vmatpush1.bf16.xpose.msra.mxu0 0
      %1033 = vmatprep.subr.bf16.mxu0 0
      %1034 = vmatpush1.bf16.xpose.msra.mxu0 0
      %1035 = vmatprep.subr.bf16.mxu0 0
      %1036 = vmatpush1.bf16.xpose.msra.mxu0 0
      %1037 = vmatprep.subr.bf16.mxu0 0
      %1038 = vmatpush1.bf16.xpose.msra.mxu0 0
      %1039 = vmatprep.subr.bf16.mxu0 0
      %1040 = vmatpush1.bf16.xpose.msra.mxu0 0
      %1041 = vmatprep.subr.bf16.mxu0 0
      %1042 = vmatpush1.bf16.xpose.msra.mxu0 0
      %1043 = vmatprep.subr.bf16.mxu0 0
      %1044 = vmatpush1.bf16.xpose.msra.mxu0 0
      %1045 = vmatprep.subr.bf16.mxu0 0
      %1046 = vmatpush1.bf16.xpose.msra.mxu0 0
      %1047 = vmatprep.subr.bf16.mxu0 0
      %1048 = vmatpush1.bf16.xpose.msra.mxu0 0
      %1049 = vmatprep.subr.bf16.mxu0 0
      %1050 = vmatpush1.bf16.xpose.msra.mxu0 0
      %1051 = vmatprep.mubr.bf16.mxu0 0
      %1052 = vmatmul.mubr.bf16.gmra.mrb[0].mxu0 %v1014
      %v1053 = vpop.f32.mrb[0].mxu0
      %v1054 = vadd.f32 0.0, %v1053
      %v1055 = vpop.f32.mrb[0].mxu0
      %v1056 = vpop.f32.mrb[0].mxu0
      %v1057 = vpop.f32.mrb[0].mxu0
      %1058 = vdwg.mxu0
      %v1059 = vpack.c.bf16 %v1054, %v1054
      %vm1060 = vcmask 125952
      %1061 = vst.msk [vmem:[%s671] sm:$0xf] %vm1060, %v1059
      %v1062 = vld [vmem:[%s9] sm:$0xf]
      %v1063 = vld [vmem:[%s9 + $0x4] sm:$0xf]
      %v1064 = vld [vmem:[%s9 + $0x8] sm:$0xf]
      %v1065 = vld [vmem:[%s9 + $0xc] sm:$0xf]
      %v1066 = vld [vmem:[%s10] sm:$0x1]
      %v1068 = vlaneseq
      %v1069 = vshrl.u32 %v1068, 7
      %v1070 = vsub.s32 0, %v1069
      %v1071 = vrot.slane %v1066, %v1070
      %v1077 = vunpack.c.l.b16 %v1062
      %v1078 = vunpack.c.l.b16 %v1063
      %v1079 = vunpack.c.l.b16 %v1064
      %v1080 = vunpack.c.l.b16 %v1065
      %v1081 = vpack.c.b16 %v1078, %v1077
      %v1082 = vpack.c.b16 %v1080, %v1079
      %1085 = vmatprep.subr.bf16.mxu0 0
      %1086 = vmatpush1.bf16.msra.mxu0 %v1081
      %1087 = vmatprep.subr.bf16.mxu0 0
      %1088 = vmatpush1.bf16.msra.mxu0 %v1082
      %1089 = vmatprep.subr.bf16.mxu0 0
      %1090 = vmatpush1.bf16.msra.mxu0 0
      %1091 = vmatprep.subr.bf16.mxu0 0
      %1092 = vmatpush1.bf16.msra.mxu0 0
      %1093 = vmatprep.subr.bf16.mxu0 0
      %1094 = vmatpush1.bf16.msra.mxu0 0
      %1095 = vmatprep.subr.bf16.mxu0 0
      %1096 = vmatpush1.bf16.msra.mxu0 0
      %1097 = vmatprep.subr.bf16.mxu0 0
      %1098 = vmatpush1.bf16.msra.mxu0 0
      %1099 = vmatprep.subr.bf16.mxu0 0
      %1100 = vmatpush1.bf16.msra.mxu0 0
      %1101 = vmatprep.subr.bf16.mxu0 0
      %1102 = vmatpush1.bf16.msra.mxu0 0
      %1103 = vmatprep.subr.bf16.mxu0 0
      %1104 = vmatpush1.bf16.msra.mxu0 0
      %1105 = vmatprep.subr.bf16.mxu0 0
      %1106 = vmatpush1.bf16.msra.mxu0 0
      %1107 = vmatprep.subr.bf16.mxu0 0
      %1108 = vmatpush1.bf16.msra.mxu0 0
      %1109 = vmatprep.subr.bf16.mxu0 0
      %1110 = vmatpush1.bf16.msra.mxu0 0
      %1111 = vmatprep.subr.bf16.mxu0 0
      %1112 = vmatpush1.bf16.msra.mxu0 0
      %1113 = vmatprep.subr.bf16.mxu0 0
      %1114 = vmatpush1.bf16.msra.mxu0 0
      %1115 = vmatprep.subr.bf16.mxu0 0
      %1116 = vmatpush1.bf16.msra.mxu0 0
      %1117 = vmatprep.mubr.bf16.mxu0 0
      %1118 = vmatmul.mubr.bf16.gmra.mrb[0].mxu0 %v1017
      %v1119 = vpop.f32.mrb[0].mxu0
      %v1120 = vadd.f32 %v1071, %v1119
      %v1121 = vpop.f32.mrb[0].mxu0
      %v1122 = vpop.f32.mrb[0].mxu0
      %v1123 = vadd.f32 %v1071, %v1122
      %v1124 = vpop.f32.mrb[0].mxu0
      %1125 = vdwg.mxu0
      %v1126 = vpack.c.bf16 %v1123, %v1120
      %v1127 = vld [vmem:[%s11] sm:$0xf]
      %v1128 = vld [vmem:[%s11 + $0x4] sm:$0xf]
      %v1129 = vld [vmem:[%s11 + $0x8] sm:$0xf]
      %v1130 = vld [vmem:[%s11 + $0xc] sm:$0xf]
      %v1131 = vld [vmem:[%s11 + $0x10] sm:$0xf]
      %v1132 = vld [vmem:[%s11 + $0x14] sm:$0xf]
      %v1133 = vld [vmem:[%s11 + $0x18] sm:$0xf]
      %v1134 = vld [vmem:[%s11 + $0x1c] sm:$0xf]
      %v1135 = vld [vmem:[%s12] sm:$0x1]
      %v1137 = vlaneseq
      %v1138 = vshrl.u32 %v1137, 7
      %v1139 = vsub.s32 0, %v1138
      %v1140 = vrot.slane %v1135, %v1139
      %v1150 = vunpack.c.l.b16 %v1127
      %v1151 = vunpack.c.l.b16 %v1128
      %v1152 = vunpack.c.l.b16 %v1129
      %v1153 = vunpack.c.l.b16 %v1130
      %v1154 = vunpack.c.l.b16 %v1131
      %v1155 = vunpack.c.l.b16 %v1132
      %v1156 = vunpack.c.l.b16 %v1133
      %v1157 = vunpack.c.l.b16 %v1134
      %v1158 = vpack.c.b16 %v1151, %v1150
      %v1159 = vpack.c.b16 %v1153, %v1152
      %v1160 = vpack.c.b16 %v1155, %v1154
      %v1161 = vpack.c.b16 %v1157, %v1156
      %vm1166 = vcmask 523264
      %v1168 = vsel %vm1166, %v1126, 0
      %1170 = vmatprep.subr.bf16.mxu0 0
      %1171 = vmatpush1.bf16.msra.mxu0 %v1158
      %1172 = vmatprep.subr.bf16.mxu0 0
      %1173 = vmatpush1.bf16.msra.mxu0 %v1159
      %1174 = vmatprep.subr.bf16.mxu0 0
      %1175 = vmatpush1.bf16.msra.mxu0 %v1160
      %1176 = vmatprep.subr.bf16.mxu0 0
      %1177 = vmatpush1.bf16.msra.mxu0 %v1161
      %1178 = vmatprep.subr.bf16.mxu0 0
      %1179 = vmatpush1.bf16.msra.mxu0 0
      %1180 = vmatprep.subr.bf16.mxu0 0
      %1181 = vmatpush1.bf16.msra.mxu0 0
      %1182 = vmatprep.subr.bf16.mxu0 0
      %1183 = vmatpush1.bf16.msra.mxu0 0
      %1184 = vmatprep.subr.bf16.mxu0 0
      %1185 = vmatpush1.bf16.msra.mxu0 0
      %1186 = vmatprep.subr.bf16.mxu0 0
      %1187 = vmatpush1.bf16.msra.mxu0 0
      %1188 = vmatprep.subr.bf16.mxu0 0
      %1189 = vmatpush1.bf16.msra.mxu0 0
      %1190 = vmatprep.subr.bf16.mxu0 0
      %1191 = vmatpush1.bf16.msra.mxu0 0
      %1192 = vmatprep.subr.bf16.mxu0 0
      %1193 = vmatpush1.bf16.msra.mxu0 0
      %1194 = vmatprep.subr.bf16.mxu0 0
      %1195 = vmatpush1.bf16.msra.mxu0 0
      %1196 = vmatprep.subr.bf16.mxu0 0
      %1197 = vmatpush1.bf16.msra.mxu0 0
      %1198 = vmatprep.subr.bf16.mxu0 0
      %1199 = vmatpush1.bf16.msra.mxu0 0
      %1200 = vmatprep.subr.bf16.mxu0 0
      %1201 = vmatpush1.bf16.msra.mxu0 0
      %1202 = vmatprep.mubr.bf16.mxu0 0
      %1203 = vmatmul.mubr.bf16.gmra.mrb[0].mxu0 %v1168
      %v1204 = vpop.f32.mrb[0].mxu0
      %v1205 = vadd.f32 %v1140, %v1204
      %v1206 = vpop.f32.mrb[0].mxu0
      %v1207 = vpop.f32.mrb[0].mxu0
      %v1208 = vadd.f32 %v1140, %v1207
      %v1209 = vpop.f32.mrb[0].mxu0
      %1210 = vdwg.mxu0
      %v1211 = vpack.c.bf16 %v1208, %v1205
      %v1212 = vld [vmem:[%s13] sm:$0xf]
      %v1213 = vld [vmem:[%s13 + $0x4] sm:$0xf]
      %v1214 = vld [vmem:[%s13 + $0x8] sm:$0xf]
      %v1215 = vld [vmem:[%s13 + $0xc] sm:$0xf]
      %v1216 = vld [vmem:[%s13 + $0x10] sm:$0xf]
      %v1217 = vld [vmem:[%s13 + $0x14] sm:$0xf]
      %v1218 = vld [vmem:[%s13 + $0x18] sm:$0xf]
      %v1219 = vld [vmem:[%s13 + $0x1c] sm:$0xf]
      %v1220 = vld [vmem:[%s13 + $0x20] sm:$0xf]
      %v1221 = vld [vmem:[%s13 + $0x24] sm:$0xf]
      %v1222 = vld [vmem:[%s13 + $0x28] sm:$0xf]
      %v1223 = vld [vmem:[%s13 + $0x2c] sm:$0xf]
      %v1224 = vld [vmem:[%s13 + $0x30] sm:$0xf]
      %v1225 = vld [vmem:[%s13 + $0x34] sm:$0xf]
      %v1226 = vld [vmem:[%s13 + $0x38] sm:$0xf]
      %v1227 = vld [vmem:[%s13 + $0x3c] sm:$0xf]
      %v1228 = vld [vmem:[%s14] sm:$0x1]
      %v1230 = vlaneseq
      %v1231 = vshrl.u32 %v1230, 7
      %v1232 = vsub.s32 0, %v1231
      %v1233 = vrot.slane %v1228, %v1232
      %v1251 = vunpack.c.l.b16 %v1212
      %v1252 = vunpack.c.l.b16 %v1213
      %v1253 = vunpack.c.l.b16 %v1214
      %v1254 = vunpack.c.l.b16 %v1215
      %v1255 = vunpack.c.l.b16 %v1216
      %v1256 = vunpack.c.l.b16 %v1217
      %v1257 = vunpack.c.l.b16 %v1218
      %v1258 = vunpack.c.l.b16 %v1219
      %v1259 = vunpack.c.l.b16 %v1220
      %v1260 = vunpack.c.l.b16 %v1221
      %v1261 = vunpack.c.l.b16 %v1222
      %v1262 = vunpack.c.l.b16 %v1223
      %v1263 = vunpack.c.l.b16 %v1224
      %v1264 = vunpack.c.l.b16 %v1225
      %v1265 = vunpack.c.l.b16 %v1226
      %v1266 = vunpack.c.l.b16 %v1227
      %v1267 = vpack.c.b16 %v1252, %v1251
      %v1268 = vpack.c.b16 %v1254, %v1253
      %v1269 = vpack.c.b16 %v1256, %v1255
      %v1270 = vpack.c.b16 %v1258, %v1257
      %v1271 = vpack.c.b16 %v1260, %v1259
      %v1272 = vpack.c.b16 %v1262, %v1261
      %v1273 = vpack.c.b16 %v1264, %v1263
      %v1274 = vpack.c.b16 %v1266, %v1265
      %1283 = vmatprep.subr.bf16.mxu0 0
      %1284 = vmatpush1.bf16.msra.mxu0 %v1267
      %1285 = vmatprep.subr.bf16.mxu0 0
      %1286 = vmatpush1.bf16.msra.mxu0 %v1268
      %1287 = vmatprep.subr.bf16.mxu0 0
      %1288 = vmatpush1.bf16.msra.mxu0 %v1269
      %1289 = vmatprep.subr.bf16.mxu0 0
      %1290 = vmatpush1.bf16.msra.mxu0 %v1270
      %1291 = vmatprep.subr.bf16.mxu0 0
      %1292 = vmatpush1.bf16.msra.mxu0 %v1271
      %1293 = vmatprep.subr.bf16.mxu0 0
      %1294 = vmatpush1.bf16.msra.mxu0 %v1272
      %1295 = vmatprep.subr.bf16.mxu0 0
      %1296 = vmatpush1.bf16.msra.mxu0 %v1273
      %1297 = vmatprep.subr.bf16.mxu0 0
      %1298 = vmatpush1.bf16.msra.mxu0 %v1274
      %1299 = vmatprep.subr.bf16.mxu0 0
      %1300 = vmatpush1.bf16.msra.mxu0 0
      %1301 = vmatprep.subr.bf16.mxu0 0
      %1302 = vmatpush1.bf16.msra.mxu0 0
      %1303 = vmatprep.subr.bf16.mxu0 0
      %1304 = vmatpush1.bf16.msra.mxu0 0
      %1305 = vmatprep.subr.bf16.mxu0 0
      %1306 = vmatpush1.bf16.msra.mxu0 0
      %1307 = vmatprep.subr.bf16.mxu0 0
      %1308 = vmatpush1.bf16.msra.mxu0 0
      %1309 = vmatprep.subr.bf16.mxu0 0
      %1310 = vmatpush1.bf16.msra.mxu0 0
      %1311 = vmatprep.subr.bf16.mxu0 0
      %1312 = vmatpush1.bf16.msra.mxu0 0
      %1313 = vmatprep.subr.bf16.mxu0 0
      %1314 = vmatpush1.bf16.msra.mxu0 0
      %1315 = vmatprep.mubr.bf16.mxu0 0
      %1316 = vmatmul.mubr.bf16.gmra.mrb[0].mxu0 %v1211
      %v1317 = vpop.f32.mrb[0].mxu0
      %v1318 = vadd.f32 %v1233, %v1317
      %v1319 = vpop.f32.mrb[0].mxu0
      %v1320 = vpop.f32.mrb[0].mxu0
      %v1321 = vadd.f32 %v1233, %v1320
      %v1322 = vpop.f32.mrb[0].mxu0
      %1323 = vdwg.mxu0
      %v1324 = vadd.f32 %v1318, %v826
      %v1325 = vadd.f32 %v1321, %v827
      %v1326 = vpack.c.bf16 %v1325, %v1324
      %v1328 = vsel %vm714, %v1011, 0
      %v1331 = vsel %vm714, %v1326, 0
      %1333 = vmatprep.subr.bf16.mxu0 0
      %1334 = vmatpush1.bf16.xpose.msra.mxu0 %v1331
      %1335 = vmatprep.subr.bf16.mxu0 0
      %1336 = vmatpush1.bf16.xpose.msra.mxu0 0
      %1337 = vmatprep.subr.bf16.mxu0 0
      %1338 = vmatpush1.bf16.xpose.msra.mxu0 0
      %1339 = vmatprep.subr.bf16.mxu0 0
      %1340 = vmatpush1.bf16.xpose.msra.mxu0 0
      %1341 = vmatprep.subr.bf16.mxu0 0
      %1342 = vmatpush1.bf16.xpose.msra.mxu0 0
      %1343 = vmatprep.subr.bf16.mxu0 0
      %1344 = vmatpush1.bf16.xpose.msra.mxu0 0
      %1345 = vmatprep.subr.bf16.mxu0 0
      %1346 = vmatpush1.bf16.xpose.msra.mxu0 0
      %1347 = vmatprep.subr.bf16.mxu0 0
      %1348 = vmatpush1.bf16.xpose.msra.mxu0 0
      %1349 = vmatprep.subr.bf16.mxu0 0
      %1350 = vmatpush1.bf16.xpose.msra.mxu0 0
      %1351 = vmatprep.subr.bf16.mxu0 0
      %1352 = vmatpush1.bf16.xpose.msra.mxu0 0
      %1353 = vmatprep.subr.bf16.mxu0 0
      %1354 = vmatpush1.bf16.xpose.msra.mxu0 0
      %1355 = vmatprep.subr.bf16.mxu0 0
      %1356 = vmatpush1.bf16.xpose.msra.mxu0 0
      %1357 = vmatprep.subr.bf16.mxu0 0
      %1358 = vmatpush1.bf16.xpose.msra.mxu0 0
      %1359 = vmatprep.subr.bf16.mxu0 0
      %1360 = vmatpush1.bf16.xpose.msra.mxu0 0
      %1361 = vmatprep.subr.bf16.mxu0 0
      %1362 = vmatpush1.bf16.xpose.msra.mxu0 0
      %1363 = vmatprep.subr.bf16.mxu0 0
      %1364 = vmatpush1.bf16.xpose.msra.mxu0 0
      %1365 = vmatprep.mubr.bf16.mxu0 0
      %1366 = vmatmul.mubr.bf16.gmra.mrb[0].mxu0 %v1328
      %v1367 = vpop.f32.mrb[0].mxu0
      %v1368 = vadd.f32 0.0, %v1367
      %v1369 = vpop.f32.mrb[0].mxu0
      %v1370 = vpop.f32.mrb[0].mxu0
      %v1371 = vpop.f32.mrb[0].mxu0
      %1372 = vdwg.mxu0
      %v1373 = vpack.c.bf16 %v1368, %v1368
      %1374 = vst.msk [vmem:[%s678] sm:$0xf] %vm1060, %v1373
      %p1375 = scmp.lt.s32.totalorder %s32, 1
      %s1376 = scalar_select %p1375, %s32, 1
      %p1377 = scmp.lt.s32.totalorder %s33, 0
      %s1378 = scalar_select %p1377, %s33, 0
      %s1379 = sadd.s32 %s1378, %s1376
      %s1380 = smul.addr %s1379, 4
      %s1381 = scalar_lea.vmem %s15, %s1380
      %p1382 = scmp.lt.s32.totalorder %s32, 1
      %s1383 = scalar_select %p1382, %s32, 1
      %p1384 = scmp.lt.s32.totalorder %s33, 0
      %s1385 = scalar_select %p1384, %s33, 0
      %s1386 = sadd.s32 %s1385, %s1383
      %s1387 = smul.addr %s1386, 4
      %s1388 = scalar_lea.vmem %s16, %s1387
      // Predicated region
      $region81: #{_lambda_.5} parent=79 // pred_check
        %p1389 = pneg %p409
      $region82: #{_lambda_.5} parent=79 // pred_check_branch
        %1391 = sbr.rel (%p1389) target = $region84
      $region83: #{_lambda_.5} parent=79 // pred_region
        _
      $region84: #{_lambda_.5} parent=79 // pred_fallthru
        _
      // Predicated region
      $region85: #{_lambda_.5} parent=79 // pred_check
        %p1392 = pneg %p437
      $region86: #{_lambda_.5} parent=79 // pred_check_branch
        %1394 = sbr.rel (%p1392) target = $region88
      $region87: #{_lambda_.5} parent=79 // pred_region
        _
      $region88: #{_lambda_.5} parent=79 // pred_fallthru
        _
    $region80: #{_lambda_.5} parent=5 // pred_fallthru
      _
    %p1395 = scmp.le.s32.totalorder 2, %s23
    // Predicated region
    $region89: #{_lambda_.5} parent=5 // pred_check
      %p1396 = pneg %p1395
    $region90: #{_lambda_.5} parent=5 // pred_check_branch
      %1398 = sbr.rel (%p1396) target = $region92
    $region91: #{_lambda_.5} parent=5 // pred_region
      %s1399 = ssub.s32 %s23, 2
      // Predicated region
      $region93: #{_lambda_.5} parent=91 // pred_check
        %p1400 = pneg %p415
      $region94: #{_lambda_.5} parent=91 // pred_check_branch
        %1402 = sbr.rel (%p1400) target = $region96
      $region95: #{_lambda_.5} parent=91 // pred_region
        %p1403 = scmp.lt.s32.totalorder %s34, 1
        %s1404 = scalar_select %p1403, %s34, 1
        %p1405 = scmp.lt.s32.totalorder %s35, 0
        %s1406 = scalar_select %p1405, %s35, 0
        %s1407 = sadd.s32 %s1406, %s1404
        %s1408 = smul.addr %s1407, 4
        %s1409 = scalar_lea.vmem %s15, %s1408
      $region96: #{_lambda_.5} parent=91 // pred_fallthru
        _
      // Predicated region
      $region97: #{_lambda_.5} parent=91 // pred_check
        %p1410 = pneg %p443
      $region98: #{_lambda_.5} parent=91 // pred_check_branch
        %1412 = sbr.rel (%p1410) target = $region100
      $region99: #{_lambda_.5} parent=91 // pred_region
        %p1413 = scmp.lt.s32.totalorder %s34, 1
        %s1414 = scalar_select %p1413, %s34, 1
        %p1415 = scmp.lt.s32.totalorder %s35, 0
        %s1416 = scalar_select %p1415, %s35, 0
        %s1417 = sadd.s32 %s1416, %s1414
        %s1418 = smul.addr %s1417, 4
        %s1419 = scalar_lea.vmem %s16, %s1418
      $region100: #{_lambda_.5} parent=91 // pred_fallthru
        _
    $region92: #{_lambda_.5} parent=5 // pred_fallthru
      _
  $region6: #{_lambda_.5} parent=0 // loop_footer
    %s27 = sadd.s32 1, %s23
  $region7: #{_lambda_.5} parent=0 // loop_footer_branch
    %22 = sbr.rel target = $region3
  $region8: #{_lambda_.5} parent=0 // loop_exit
    _

</llo_original>
